<compile_context>
chip_gen: v5e
topology: v5e:2x2
jax: 0.10.0
libtpu: 0.0.40
codegen_flags: <defaults>
</compile_context>

<pallas_src>
import numpy as np
import jax
import jax.numpy as jnp
from jax.experimental import pallas as pl
from jax.experimental.pallas import tpu as pltpu


def _adaptive_avg_pool_matrix(in_size, out_size):
    """Row i averages x[start:end] with PyTorch AdaptiveAvgPool2d bin rules."""
    P = np.zeros((out_size, in_size), np.float32)
    for i in range(out_size):
        start = (i * in_size) // out_size
        end = -((-(i + 1) * in_size) // out_size)  # ceil
        P[i, start:end] = 1.0 / (end - start)
    return P


def _bilinear_upsample_matrix(out_size, in_size):
    """U[o, i]: bilinear weights matching F.interpolate(align_corners=True)."""
    U = np.zeros((out_size, in_size), np.float32)
    if in_size == 1:
        U[:, 0] = 1.0
        return U
    for o in range(out_size):
        src = o * (in_size - 1) / (out_size - 1) if out_size > 1 else 0.0
        i0 = min(int(np.floor(src)), in_size - 1)
        i1 = min(i0 + 1, in_size - 1)
        frac = src - i0
        U[o, i0] += 1.0 - frac
        U[o, i1] += frac
    return U


def _vmem_capacity_bytes():
    """Per-core VMEM capacity (v5e/v6e 128 MiB, v7x 64 MiB)."""
    try:
        return int(pltpu.get_tpu_info().vmem_capacity_bytes)
    except Exception:
        return 64 * 1024 * 1024  # conservative default (v7x per-TensorCore)


def _choose_c_tile(C, HW_pad, itemsize, tile_budget_bytes):
    """Largest channel tile (C itself or a 128-multiple divisor of C) whose
    double-buffered x + output blocks plus f32 temporaries fit the budget."""
    def tile_bytes(ct):
        return ct * HW_pad * (4 * itemsize + 4)
    if C <= 256 or tile_bytes(C) <= tile_budget_bytes:
        return C
    for ct in range((C // 128) * 128, 127, -128):
        if C % ct == 0 and tile_bytes(ct) <= tile_budget_bytes:
            return ct
    for ct in range(128, C, 128):
        if C % ct == 0:
            return ct
    # TODO(synk): pad C to a 128 multiple for channel counts with no
    # 128-multiple divisor (e.g. C=300) instead of one huge unaligned block.
    return C


def _make_pyramid_kernel(n_c, C_tile, n_branch):
    """Two-phase fused kernel over a channel grid axis of length 2*n_c."""

    def kernel(x_ref, p_ref, w_ref, u_ref, bm_ref, o_ref, acc_ref, copy_sem):
        c = pl.program_id(1)

        @pl.when(c == 0)
        def _init():
            acc_ref[...] = jnp.zeros_like(acc_ref)

        @pl.when(c < n_c)
        def _pool_and_conv():
            # x passthrough: this step's output tile is exactly rows
            # [c*C_tile, (c+1)*C_tile) of the concat.  Copy it with a local
            # VMEM->VMEM DMA so it does not compete for the vld/vst slots
            # that also feed the MXU (v5e has a single vector-store slot).
            cp = pltpu.make_async_copy(x_ref, o_ref, copy_sem)
            cp.start()

            x = x_ref[...]                                         # (C_tile, HW)
            # All pyramid bins of all branches in one MXU pass (S = sum(s*s)).
            pooled = jnp.dot(x, p_ref[...],
                             preferred_element_type=jnp.float32)   # (C_tile, S)
            # Stacked, BN-folded 1x1 conv; VMEM-resident weight, indexed by
            # channel tile; channel reduction accumulated in f32 scratch.
            w_c = w_ref[c]                                         # (n_branch, C_tile)
            acc_ref[...] += jnp.dot(w_c, pooled.astype(w_c.dtype),
                                    preferred_element_type=jnp.float32)

            cp.wait()

        @pl.when(c >= n_c)
        def _relu_and_upsample():
            r0 = pl.multiple_of((c - n_c) * C_tile, C_tile)
            rows = pl.ds(r0, C_tile)
            # bm holds the folded BN bias on each branch's own bin columns and
            # -1e30 elsewhere, so the ReLU zeroes every cross-branch term
            # exactly.  acc and bm MUST stay f32 (-1e30 overflows fp16).
            f = jnp.maximum(acc_ref[rows, :] + bm_ref[rows, :], 0.0)  # (C_tile, S)
            up = jnp.dot(f.astype(u_ref.dtype), u_ref[...],
                         preferred_element_type=jnp.float32)          # (C_tile, HW)
            o_ref[...] = up.astype(o_ref.dtype)

    return kernel


def pyramid_pooling(x, params, spp_size=(1, 2, 3, 6), eps=1e-5):
    """JAX/Pallas equivalent of PyramidPooling.forward.

    x: (B, C, H, W).  x.dtype sets the MXU operand / output dtype (use
    bfloat16 to halve HBM traffic); accumulation and BN/ReLU stay in f32.
    params: one dict per branch with w=(Cout, C), gamma, beta, mean, var."""
    B, C, H, Wd = x.shape
    HW = H * Wd
    dtype = x.dtype
    itemsize = jnp.dtype(dtype).itemsize
    Cout = params[0]["w"].shape[0]
    n_branch = len(spp_size) * Cout
    if n_branch != C:
        raise ValueError(
            "fused output row-tiling assumes sum of branch output channels == "
            f"in_channels (PSPNet: 4 branches x C//4); got {n_branch} vs {C}")
    C_total = C + n_branch
    S = sum(s * s for s in spp_size)

    # Lane-pad the flattened spatial dim so every store is an unmasked,
    # lane-dense vst (real PSPNet maps 60x60 / 90x90 are not 128-aligned).
    HW_pad = ((HW + 127) // 128) * 128

    # --- structural matrices (pool / upsample / branch mask), built on host ---
    p_cols, u_rows, offs = [], [], []
    off = 0
    for s in spp_size:
        ph = _adaptive_avg_pool_matrix(H, s)
        pw = _adaptive_avg_pool_matrix(Wd, s)
        uh = _bilinear_upsample_matrix(H, s)
        uw = _bilinear_upsample_matrix(Wd, s)
        p_cols.append(np.kron(ph, pw).T)          # (HW, s*s)
        u_rows.append(np.kron(uh, uw).T)          # (s*s, HW)
        offs.append(off)
        off += s * s
    P_np = np.zeros((HW_pad, S), np.float32)
    P_np[:HW, :] = np.concatenate(p_cols, axis=1)     # zero pad rows -> no effect
    U_np = np.zeros((S, HW_pad), np.float32)
    U_np[:, :HW] = np.concatenate(u_rows, axis=0)     # padded cols sliced off later
    # P/U cast to x.dtype (bf16 carries ~3 significant digits of the 1/bin_area
    # and bilinear fractions -- within tolerance; keep f32 if ever needed).
    P_all = jnp.asarray(P_np, dtype)                  # (HW_pad, S)
    U_all = jnp.asarray(U_np, dtype)                  # (S, HW_pad)

    mask_np = np.zeros((n_branch, S), np.float32)
    for k, s in enumerate(spp_size):
        mask_np[k * Cout:(k + 1) * Cout, offs[k]:offs[k] + s * s] = 1.0
    mask = jnp.asarray(mask_np)

    # --- fold BatchNorm (eval) into the 1x1 convs; stack all branches ---------
    w_blocks, b_rows = [], []
    for p in params:
        scale = p["gamma"] / jnp.sqrt(p["var"] + eps)
        w_blocks.append(scale[:, None] * p["w"])
        b_rows.append(p["beta"] - p["mean"] * scale)
    W_stacked = jnp.concatenate(w_blocks, axis=0).astype(dtype)      # (n_branch, C)
    bias_all = jnp.concatenate(b_rows, axis=0).astype(jnp.float32)   # (n_branch,)
    # BN bias on the branch's own bins, -1e30 elsewhere (ReLU -> exact 0).
    # MUST stay f32: -1e30 would overflow fp16 (bf16 would still be fine).
    bias_mask = mask * bias_all[:, None] - 1e30 * (1.0 - mask)       # f32 (n_branch, S)

    # --- size channel tile / VMEM limit against the queried capacity ----------
    vmem_cap = _vmem_capacity_bytes()
    fixed_bytes = (2 * (n_branch * C + 2 * S * HW_pad) * itemsize  # W, P, U (worst-case 2x)
                   + 3 * n_branch * S * 4                          # bias mask (2x) + acc scratch
                   + (2 << 20))                                    # headroom
    tile_budget = max(int(0.85 * vmem_cap) - fixed_bytes, 4 << 20)
    C_tile = _choose_c_tile(C, HW_pad, itemsize, tile_budget)
    n_c = C // C_tile

    x_flat = x.reshape(B, C, HW)
    if HW_pad != HW:
        x_flat = jnp.pad(x_flat, ((0, 0), (0, 0), (0, HW_pad - HW)))

    # Pre-split the stacked weight into channel tiles so the whole matrix is
    # VMEM-resident (constant-index BlockSpec) and each step indexes w_ref[c].
    W3 = W_stacked.reshape(n_branch, n_c, C_tile).transpose(1, 0, 2)  # (n_c, n_branch, C_tile)

    vmem_needed = fixed_bytes + C_tile * HW_pad * (4 * itemsize + 4)
    vmem_limit = int(min(max(vmem_needed, 32 << 20), vmem_cap - (2 << 20)))

    flops = B * (2 * C * HW_pad * S + 2 * n_branch * C * S + 2 * n_branch * S * HW_pad)
    bytes_accessed = ((B * C * HW_pad + B * C_total * HW_pad) * itemsize
                      + (P_all.size + U_all.size + W3.size) * itemsize
                      + bias_mask.size * 4)

    kernel = _make_pyramid_kernel(n_c, C_tile, n_branch)

    # NOTE(v7x): only the batch axis is "parallel"; with B == 1 one of the two
    # TensorCores idles.  TODO(synk): for B == 1 inference split the channel
    # tile axis across cores with per-core partial accumulators.
    def _call(const_pipeline_mode):
        ck = ({} if const_pipeline_mode is None
              else {"pipeline_mode": const_pipeline_mode})
        return pl.pallas_call(
            kernel,
            out_shape=jax.ShapeDtypeStruct((B, C_total, HW_pad), dtype),
            grid=(B, 2 * n_c),
            in_specs=[
                # x: clamp the tile index so the tail (upsample) steps reuse
                # the already-resident block instead of re-DMAing it.
                pl.BlockSpec((pl.Squeezed(), C_tile, HW_pad),
                             lambda b, c: (b, jnp.minimum(c, n_c - 1), 0)),
                pl.BlockSpec((HW_pad, S), lambda b, c: (0, 0), **ck),
                pl.BlockSpec((n_c, n_branch, C_tile), lambda b, c: (0, 0, 0), **ck),
                pl.BlockSpec((S, HW_pad), lambda b, c: (0, 0), **ck),
                pl.BlockSpec((n_branch, S), lambda b, c: (0, 0), **ck),
            ],
            out_specs=pl.BlockSpec((pl.Squeezed(), C_tile, HW_pad),
                                   lambda b, c: (b, c, 0)),
            scratch_shapes=[pltpu.VMEM((n_branch, S), jnp.float32),
                            pltpu.SemaphoreType.DMA(())],
            compiler_params=pltpu.CompilerParams(
                dimension_semantics=("parallel", "arbitrary"),
                vmem_limit_bytes=vmem_limit),
            cost_estimate=pl.CostEstimate(flops=int(flops), transcendentals=0,
                                          bytes_accessed=int(bytes_accessed)),
        )(x_flat, P_all, W3, U_all, bias_mask)

    try:
        # Constant-index operands only need a single VMEM buffer.
        out_flat = _call(pl.Buffered(1))
    except Exception:
        # Fallback for jax versions without single-buffer pipeline_mode support.
        out_flat = _call(None)

    if HW_pad != HW:
        out_flat = out_flat[:, :, :HW]
    return out_flat.reshape(B, C_total, H, Wd)


def _reference(x, params, spp_size=(1, 2, 3, 6), eps=1e-5):
    """Pure numpy reference reproducing the PyTorch forward."""
    x = np.asarray(x, np.float32)
    B, C, H, W = x.shape
    feats = [x]
    for s, p in zip(spp_size, params):
        pooled = np.zeros((B, C, s, s), np.float32)
        for i in range(s):
            h0 = (i * H) // s
            h1 = -((-(i + 1) * H) // s)
            for j in range(s):
                w0 = (j * W) // s
                w1 = -((-(j + 1) * W) // s)
                pooled[:, :, i, j] = x[:, :, h0:h1, w0:w1].mean(axis=(2, 3))
        w = np.asarray(p["w"]); gamma = np.asarray(p["gamma"])
        beta = np.asarray(p["beta"]); mean = np.asarray(p["mean"])
        var = np.asarray(p["var"])
        f = np.einsum("oc,bcij->boij", w, pooled)
        f = (f - mean[None, :, None, None]) / np.sqrt(var[None, :, None, None] + eps)
        f = f * gamma[None, :, None, None] + beta[None, :, None, None]
        f = np.maximum(f, 0.0)
        uh = _bilinear_upsample_matrix(H, s)
        uw = _bilinear_upsample_matrix(W, s)
        up = np.einsum("ht,botu,wu->bohw", uh, f, uw)
        feats.append(up.astype(np.float32))
    return np.concatenate(feats, axis=1)


if __name__ == "__main__":
    key = jax.random.PRNGKey(0)
    B, C, H, W = 2, 8, 16, 16
    Cout = C // 4
    spp = (1, 2, 3, 6)

    keys = jax.random.split(key, 1 + len(spp))
    x = jax.random.normal(keys[0], (B, C, H, W), jnp.float32)

    # Deterministic synthetic parameters (conv weight + BatchNorm eval stats).
    params = []
    for i, s in enumerate(spp):
        params.append(dict(
            w=jax.random.normal(keys[1 + i], (Cout, C), jnp.float32) * 0.2,
            gamma=1.0 + 0.05 * jnp.arange(Cout, dtype=jnp.float32),
            beta=0.02 * jnp.arange(Cout, dtype=jnp.float32) - 0.01,
            mean=0.03 * jnp.arange(Cout, dtype=jnp.float32),
            var=1.0 + 0.1 * jnp.arange(Cout, dtype=jnp.float32),
        ))

    ref = _reference(x, params, spp)

    # f32 path: tight correctness check.
    out = jax.block_until_ready(pyramid_pooling(x, params, spp))
    assert out.shape == (B, C + 4 * Cout, H, W), out.shape
    np.testing.assert_allclose(np.asarray(out), ref, rtol=1e-4, atol=1e-4)

    # bf16 path (halves HBM traffic on the memory-bound kernel): loose check.
    out_bf16 = jax.block_until_ready(
        pyramid_pooling(x.astype(jnp.bfloat16), params, spp))
    assert out_bf16.dtype == jnp.bfloat16
    np.testing.assert_allclose(np.asarray(out_bf16, dtype=np.float32), ref,
                               rtol=5e-2, atol=5e-2)

    print("KERNEL_OK")
</pallas_src>

<mosaic_0001>
module attributes {stable_mosaic.version = 11 : i64} {
  func.func @kernel(%arg0: i32, %arg1: i32, %arg2: memref<1x8x256xf32, #tpu.memory_space<vmem>>, %arg3: memref<256x50xf32, #tpu.memory_space<vmem>>, %arg4: memref<1x8x8xf32, #tpu.memory_space<vmem>>, %arg5: memref<50x256xf32, #tpu.memory_space<vmem>>, %arg6: memref<8x50xf32, #tpu.memory_space<vmem>>, %arg7: memref<1x8x256xf32, #tpu.memory_space<vmem>>, %arg8: memref<8x50xf32, #tpu.memory_space<vmem>>, %arg9: memref<!tpu.dma_semaphore, #tpu.memory_space<semaphore_mem>>) attributes {dimension_semantics = [#tpu.dimension_semantics<parallel>, #tpu.dimension_semantics<arbitrary>], iteration_bounds = array<i64: 2, 2>, scalar_prefetch = 0 : i64, scratch_operands = 2 : i64, tpu.core_type = #tpu.core_type<tc>, window_params = [{transform_indices = @transform_0, window_bounds = array<i64: 1, 8, 256>}, {pipeline_mode = #tpu.pipeline_mode<synchronous>, transform_indices = @transform_1, window_bounds = array<i64: 256, 50>}, {pipeline_mode = #tpu.pipeline_mode<synchronous>, transform_indices = @transform_2, window_bounds = array<i64: 1, 8, 8>}, {pipeline_mode = #tpu.pipeline_mode<synchronous>, transform_indices = @transform_3, window_bounds = array<i64: 50, 256>}, {pipeline_mode = #tpu.pipeline_mode<synchronous>, transform_indices = @transform_4, window_bounds = array<i64: 8, 50>}, {transform_indices = @transform_5, window_bounds = array<i64: 1, 8, 256>}]} {
    %c0_i32 = arith.constant 0 : i32
    %0 = arith.cmpi eq, %arg1, %c0_i32 : i32
    %1 = arith.extui %0 : i1 to i32
    %c0_i32_0 = arith.constant 0 : i32
    %2 = arith.cmpi ne, %1, %c0_i32_0 : i32
    scf.if %2 {
      %cst = arith.constant 0.000000e+00 : f32
      %9 = vector.broadcast %cst : f32 to vector<8x50xf32>
      %c0 = arith.constant 0 : index
      %c0_4 = arith.constant 0 : index
      %10 = vector.load %arg8[%c0, %c0_4] : memref<8x50xf32, #tpu.memory_space<vmem>>, vector<8x50xf32>
      tpu.vector_store %arg8[%c0, %c0_4], %9 {strides = array<i32>} : memref<8x50xf32, #tpu.memory_space<vmem>>, vector<8x50xf32>,
    } else {
    }
    %c1_i32 = arith.constant 1 : i32
    %3 = arith.cmpi slt, %arg1, %c1_i32 : i32
    %4 = arith.extui %3 : i1 to i32
    %c0_i32_1 = arith.constant 0 : i32
    %5 = arith.cmpi ne, %4, %c0_i32_1 : i32
    scf.if %5 {
      tpu.enqueue_dma source(%arg2 : memref<1x8x256xf32, #tpu.memory_space<vmem>>) target(%arg7 : memref<1x8x256xf32, #tpu.memory_space<vmem>>) target_semaphore(%arg9 : memref<!tpu.dma_semaphore, #tpu.memory_space<semaphore_mem>>)
      %c0 = arith.constant 0 : index
      %c0_4 = arith.constant 0 : index
      %c0_5 = arith.constant 0 : index
      %9 = vector.load %arg2[%c0, %c0_4, %c0_5] : memref<1x8x256xf32, #tpu.memory_space<vmem>>, vector<1x8x256xf32>
      %10 = vector.shape_cast %9 : vector<1x8x256xf32> to vector<8x256xf32>
      %c0_6 = arith.constant 0 : index
      %c0_7 = arith.constant 0 : index
      %11 = vector.load %arg3[%c0_6, %c0_7] : memref<256x50xf32, #tpu.memory_space<vmem>>, vector<256x50xf32>
      %cst = arith.constant dense<0.000000e+00> : vector<8x50xf32>
      %12 = tpu.matmul %10, %11, %cst {dimension_numbers = #tpu.dot_dimension_numbers<[1], [0], [0], [1], [0, 0, 1, 1], [], []>} : vector<8x256xf32>, vector<256x50xf32>, vector<8x50xf32> -> vector<8x50xf32>
      %13 = arith.index_cast %arg1 : i32 to index
      %c0_8 = arith.constant 0 : index
      %c0_9 = arith.constant 0 : index
      %14 = vector.load %arg4[%13, %c0_8, %c0_9] : memref<1x8x8xf32, #tpu.memory_space<vmem>>, vector<1x8x8xf32>
      %15 = vector.shape_cast %14 : vector<1x8x8xf32> to vector<8x8xf32>
      %c0_10 = arith.constant 0 : index
      %c0_11 = arith.constant 0 : index
      %16 = vector.load %arg8[%c0_10, %c0_11] : memref<8x50xf32, #tpu.memory_space<vmem>>, vector<8x50xf32>
      %cst_12 = arith.constant dense<0.000000e+00> : vector<8x50xf32>
      %17 = tpu.matmul %15, %12, %cst_12 {dimension_numbers = #tpu.dot_dimension_numbers<[1], [0], [0], [1], [0, 0, 1, 1], [], []>} : vector<8x8xf32>, vector<8x50xf32>, vector<8x50xf32> -> vector<8x50xf32>
      %18 = arith.addf %16, %17 : vector<8x50xf32>
      %c0_13 = arith.constant 0 : index
      %c0_14 = arith.constant 0 : index
      %19 = vector.load %arg8[%c0_13, %c0_14] : memref<8x50xf32, #tpu.memory_space<vmem>>, vector<8x50xf32>
      tpu.vector_store %arg8[%c0_13, %c0_14], %18 {strides = array<i32>} : memref<8x50xf32, #tpu.memory_space<vmem>>, vector<8x50xf32>,
      tpu.wait_dma2 semaphore(%arg9 : memref<!tpu.dma_semaphore, #tpu.memory_space<semaphore_mem>>) src(%arg2 : memref<1x8x256xf32, #tpu.memory_space<vmem>>) dst(%arg7 : memref<1x8x256xf32, #tpu.memory_space<vmem>>)
    } else {
    }
    %c1_i32_2 = arith.constant 1 : i32
    %6 = arith.cmpi sge, %arg1, %c1_i32_2 : i32
    %7 = arith.extui %6 : i1 to i32
    %c0_i32_3 = arith.constant 0 : i32
    %8 = arith.cmpi ne, %7, %c0_i32_3 : i32
    scf.if %8 {
      %c1_i32_4 = arith.constant 1 : i32
      %9 = arith.subi %arg1, %c1_i32_4 : i32
      %c8_i32 = arith.constant 8 : i32
      %10 = arith.muli %9, %c8_i32 : i32
      %11 = tpu.assume_multiple %10, 8 : i32
      %12 = arith.index_cast %11 : i32 to index
      %c0 = arith.constant 0 : index
      %13 = vector.load %arg8[%12, %c0] : memref<8x50xf32, #tpu.memory_space<vmem>>, vector<8x50xf32>
      %14 = arith.index_cast %11 : i32 to index
      %c0_5 = arith.constant 0 : index
      %15 = vector.load %arg6[%14, %c0_5] : memref<8x50xf32, #tpu.memory_space<vmem>>, vector<8x50xf32>
      %16 = arith.addf %13, %15 : vector<8x50xf32>
      %cst = arith.constant 0.000000e+00 : f32
      %17 = vector.broadcast %cst : f32 to vector<8x50xf32>
      %18 = arith.maximumf %16, %17 : vector<8x50xf32>
      %c0_6 = arith.constant 0 : index
      %c0_7 = arith.constant 0 : index
      %19 = vector.load %arg5[%c0_6, %c0_7] : memref<50x256xf32, #tpu.memory_space<vmem>>, vector<50x256xf32>
      %cst_8 = arith.constant dense<0.000000e+00> : vector<8x256xf32>
      %20 = tpu.matmul %18, %19, %cst_8 {dimension_numbers = #tpu.dot_dimension_numbers<[1], [0], [0], [1], [0, 0, 1, 1], [], []>} : vector<8x50xf32>, vector<50x256xf32>, vector<8x256xf32> -> vector<8x256xf32>
      %c0_9 = arith.constant 0 : index
      %c0_10 = arith.constant 0 : index
      %c0_11 = arith.constant 0 : index
      %21 = vector.load %arg7[%c0_9, %c0_10, %c0_11] : memref<1x8x256xf32, #tpu.memory_space<vmem>>, vector<1x8x256xf32>
      %22 = vector.shape_cast %21 : vector<1x8x256xf32> to vector<8x256xf32>
      %23 = vector.shape_cast %20 : vector<8x256xf32> to vector<1x8x256xf32>
      tpu.vector_store %arg7[%c0_9, %c0_10, %c0_11], %23 {strides = array<i32>} : memref<1x8x256xf32, #tpu.memory_space<vmem>>, vector<1x8x256xf32>,
    } else {
    }
    return
  }
  func.func @transform_0(%arg0: i32, %arg1: i32) -> (i32, i32, i32) {
    %c0_i32 = arith.constant 0 : i32
    %0 = arith.minsi %arg1, %c0_i32 : i32
    %c0_i32_0 = arith.constant 0 : i32
    %c0_i32_1 = arith.constant 0 : i32
    return %arg0, %0, %c0_i32_0 : i32, i32, i32
  }
  func.func @transform_1(%arg0: i32, %arg1: i32) -> (i32, i32) {
    %c0_i32 = arith.constant 0 : i32
    %c0_i32_0 = arith.constant 0 : i32
    %c0_i32_1 = arith.constant 0 : i32
    return %c0_i32, %c0_i32_0 : i32, i32
  }
  func.func @transform_2(%arg0: i32, %arg1: i32) -> (i32, i32, i32) {
    %c0_i32 = arith.constant 0 : i32
    %c0_i32_0 = arith.constant 0 : i32
    %c0_i32_1 = arith.constant 0 : i32
    %c0_i32_2 = arith.constant 0 : i32
    return %c0_i32, %c0_i32_0, %c0_i32_1 : i32, i32, i32
  }
  func.func @transform_3(%arg0: i32, %arg1: i32) -> (i32, i32) {
    %c0_i32 = arith.constant 0 : i32
    %c0_i32_0 = arith.constant 0 : i32
    %c0_i32_1 = arith.constant 0 : i32
    return %c0_i32, %c0_i32_0 : i32, i32
  }
  func.func @transform_4(%arg0: i32, %arg1: i32) -> (i32, i32) {
    %c0_i32 = arith.constant 0 : i32
    %c0_i32_0 = arith.constant 0 : i32
    %c0_i32_1 = arith.constant 0 : i32
    return %c0_i32, %c0_i32_0 : i32, i32
  }
  func.func @transform_5(%arg0: i32, %arg1: i32) -> (i32, i32, i32) {
    %c0_i32 = arith.constant 0 : i32
    %c0_i32_0 = arith.constant 0 : i32
    return %arg0, %arg1, %c0_i32 : i32, i32, i32
  }
}

module attributes {stable_mosaic.version = 11 : i64} {
  func.func @kernel(%arg0: i32, %arg1: i32, %arg2: memref<1x8x256xf32, #tpu.memory_space<vmem>>, %arg3: memref<256x50xf32, #tpu.memory_space<vmem>>, %arg4: memref<1x8x8xf32, #tpu.memory_space<vmem>>, %arg5: memref<50x256xf32, #tpu.memory_space<vmem>>, %arg6: memref<8x50xf32, #tpu.memory_space<vmem>>, %arg7: memref<1x8x256xf32, #tpu.memory_space<vmem>>, %arg8: memref<8x50xf32, #tpu.memory_space<vmem>>, %arg9: memref<!tpu.dma_semaphore, #tpu.memory_space<semaphore_mem>>) attributes {dimension_semantics = [#tpu.dimension_semantics<parallel>, #tpu.dimension_semantics<arbitrary>], iteration_bounds = array<i64: 2, 2>, scalar_prefetch = 0 : i64, scratch_operands = 2 : i64, tpu.core_type = #tpu.core_type<tc>, window_params = [{transform_indices = @transform_0, window_bounds = array<i64: 1, 8, 256>}, {pipeline_mode = #tpu.pipeline_mode<synchronous>, transform_indices = @transform_1, window_bounds = array<i64: 256, 50>}, {pipeline_mode = #tpu.pipeline_mode<synchronous>, transform_indices = @transform_2, window_bounds = array<i64: 1, 8, 8>}, {pipeline_mode = #tpu.pipeline_mode<synchronous>, transform_indices = @transform_3, window_bounds = array<i64: 50, 256>}, {pipeline_mode = #tpu.pipeline_mode<synchronous>, transform_indices = @transform_4, window_bounds = array<i64: 8, 50>}, {transform_indices = @transform_5, window_bounds = array<i64: 1, 8, 256>}]} {
    %c0_i32 = arith.constant 0 : i32
    %0 = arith.cmpi eq, %arg1, %c0_i32 : i32
    %1 = arith.extui %0 : i1 to i32
    %c0_i32_0 = arith.constant 0 : i32
    %2 = arith.cmpi ne, %1, %c0_i32_0 : i32
    scf.if %2 {
      %cst = arith.constant 0.000000e+00 : f32
      %9 = vector.broadcast %cst : f32 to vector<8x50xf32>
      %c0 = arith.constant 0 : index
      %c0_4 = arith.constant 0 : index
      %10 = vector.load %arg8[%c0, %c0_4] : memref<8x50xf32, #tpu.memory_space<vmem>>, vector<8x50xf32>
      tpu.vector_store %arg8[%c0, %c0_4], %9 {strides = array<i32>} : memref<8x50xf32, #tpu.memory_space<vmem>>, vector<8x50xf32>,
    } else {
    }
    %c1_i32 = arith.constant 1 : i32
    %3 = arith.cmpi slt, %arg1, %c1_i32 : i32
    %4 = arith.extui %3 : i1 to i32
    %c0_i32_1 = arith.constant 0 : i32
    %5 = arith.cmpi ne, %4, %c0_i32_1 : i32
    scf.if %5 {
      tpu.enqueue_dma source(%arg2 : memref<1x8x256xf32, #tpu.memory_space<vmem>>) target(%arg7 : memref<1x8x256xf32, #tpu.memory_space<vmem>>) target_semaphore(%arg9 : memref<!tpu.dma_semaphore, #tpu.memory_space<semaphore_mem>>)
      %c0 = arith.constant 0 : index
      %c0_4 = arith.constant 0 : index
      %c0_5 = arith.constant 0 : index
      %9 = vector.load %arg2[%c0, %c0_4, %c0_5] : memref<1x8x256xf32, #tpu.memory_space<vmem>>, vector<1x8x256xf32>
      %10 = vector.shape_cast %9 : vector<1x8x256xf32> to vector<8x256xf32>
      %c0_6 = arith.constant 0 : index
      %c0_7 = arith.constant 0 : index
      %11 = vector.load %arg3[%c0_6, %c0_7] : memref<256x50xf32, #tpu.memory_space<vmem>>, vector<256x50xf32>
      %cst = arith.constant dense<0.000000e+00> : vector<8x50xf32>
      %12 = tpu.matmul %10, %11, %cst {dimension_numbers = #tpu.dot_dimension_numbers<[1], [0], [0], [1], [0, 0, 1, 1], [], []>} : vector<8x256xf32>, vector<256x50xf32>, vector<8x50xf32> -> vector<8x50xf32>
      %13 = arith.index_cast %arg1 : i32 to index
      %c0_8 = arith.constant 0 : index
      %c0_9 = arith.constant 0 : index
      %14 = vector.load %arg4[%13, %c0_8, %c0_9] : memref<1x8x8xf32, #tpu.memory_space<vmem>>, vector<1x8x8xf32>
      %15 = vector.shape_cast %14 : vector<1x8x8xf32> to vector<8x8xf32>
      %c0_10 = arith.constant 0 : index
      %c0_11 = arith.constant 0 : index
      %16 = vector.load %arg8[%c0_10, %c0_11] : memref<8x50xf32, #tpu.memory_space<vmem>>, vector<8x50xf32>
      %cst_12 = arith.constant dense<0.000000e+00> : vector<8x50xf32>
      %17 = tpu.matmul %15, %12, %cst_12 {dimension_numbers = #tpu.dot_dimension_numbers<[1], [0], [0], [1], [0, 0, 1, 1], [], []>} : vector<8x8xf32>, vector<8x50xf32>, vector<8x50xf32> -> vector<8x50xf32>
      %18 = arith.addf %16, %17 : vector<8x50xf32>
      %c0_13 = arith.constant 0 : index
      %c0_14 = arith.constant 0 : index
      %19 = vector.load %arg8[%c0_13, %c0_14] : memref<8x50xf32, #tpu.memory_space<vmem>>, vector<8x50xf32>
      tpu.vector_store %arg8[%c0_13, %c0_14], %18 {strides = array<i32>} : memref<8x50xf32, #tpu.memory_space<vmem>>, vector<8x50xf32>,
      tpu.wait_dma2 semaphore(%arg9 : memref<!tpu.dma_semaphore, #tpu.memory_space<semaphore_mem>>) src(%arg2 : memref<1x8x256xf32, #tpu.memory_space<vmem>>) dst(%arg7 : memref<1x8x256xf32, #tpu.memory_space<vmem>>)
    } else {
    }
    %c1_i32_2 = arith.constant 1 : i32
    %6 = arith.cmpi sge, %arg1, %c1_i32_2 : i32
    %7 = arith.extui %6 : i1 to i32
    %c0_i32_3 = arith.constant 0 : i32
    %8 = arith.cmpi ne, %7, %c0_i32_3 : i32
    scf.if %8 {
      %c1_i32_4 = arith.constant 1 : i32
      %9 = arith.subi %arg1, %c1_i32_4 : i32
      %c8_i32 = arith.constant 8 : i32
      %10 = arith.muli %9, %c8_i32 : i32
      %11 = tpu.assume_multiple %10, 8 : i32
      %12 = arith.index_cast %11 : i32 to index
      %c0 = arith.constant 0 : index
      %13 = vector.load %arg8[%12, %c0] : memref<8x50xf32, #tpu.memory_space<vmem>>, vector<8x50xf32>
      %14 = arith.index_cast %11 : i32 to index
      %c0_5 = arith.constant 0 : index
      %15 = vector.load %arg6[%14, %c0_5] : memref<8x50xf32, #tpu.memory_space<vmem>>, vector<8x50xf32>
      %16 = arith.addf %13, %15 : vector<8x50xf32>
      %cst = arith.constant 0.000000e+00 : f32
      %17 = vector.broadcast %cst : f32 to vector<8x50xf32>
      %18 = arith.maximumf %16, %17 : vector<8x50xf32>
      %c0_6 = arith.constant 0 : index
      %c0_7 = arith.constant 0 : index
      %19 = vector.load %arg5[%c0_6, %c0_7] : memref<50x256xf32, #tpu.memory_space<vmem>>, vector<50x256xf32>
      %cst_8 = arith.constant dense<0.000000e+00> : vector<8x256xf32>
      %20 = tpu.matmul %18, %19, %cst_8 {dimension_numbers = #tpu.dot_dimension_numbers<[1], [0], [0], [1], [0, 0, 1, 1], [], []>} : vector<8x50xf32>, vector<50x256xf32>, vector<8x256xf32> -> vector<8x256xf32>
      %c0_9 = arith.constant 0 : index
      %c0_10 = arith.constant 0 : index
      %c0_11 = arith.constant 0 : index
      %21 = vector.load %arg7[%c0_9, %c0_10, %c0_11] : memref<1x8x256xf32, #tpu.memory_space<vmem>>, vector<1x8x256xf32>
      %22 = vector.shape_cast %21 : vector<1x8x256xf32> to vector<8x256xf32>
      %23 = vector.shape_cast %20 : vector<8x256xf32> to vector<1x8x256xf32>
      tpu.vector_store %arg7[%c0_9, %c0_10, %c0_11], %23 {strides = array<i32>} : memref<1x8x256xf32, #tpu.memory_space<vmem>>, vector<1x8x256xf32>,
    } else {
    }
    return
  }
  func.func @transform_0(%arg0: i32, %arg1: i32) -> (i32, i32, i32) {
    %c0_i32 = arith.constant 0 : i32
    %0 = arith.minsi %arg1, %c0_i32 : i32
    %c0_i32_0 = arith.constant 0 : i32
    %c0_i32_1 = arith.constant 0 : i32
    return %arg0, %0, %c0_i32_0 : i32, i32, i32
  }
  func.func @transform_1(%arg0: i32, %arg1: i32) -> (i32, i32) {
    %c0_i32 = arith.constant 0 : i32
    %c0_i32_0 = arith.constant 0 : i32
    %c0_i32_1 = arith.constant 0 : i32
    return %c0_i32, %c0_i32_0 : i32, i32
  }
  func.func @transform_2(%arg0: i32, %arg1: i32) -> (i32, i32, i32) {
    %c0_i32 = arith.constant 0 : i32
    %c0_i32_0 = arith.constant 0 : i32
    %c0_i32_1 = arith.constant 0 : i32
    %c0_i32_2 = arith.constant 0 : i32
    return %c0_i32, %c0_i32_0, %c0_i32_1 : i32, i32, i32
  }
  func.func @transform_3(%arg0: i32, %arg1: i32) -> (i32, i32) {
    %c0_i32 = arith.constant 0 : i32
    %c0_i32_0 = arith.constant 0 : i32
    %c0_i32_1 = arith.constant 0 : i32
    return %c0_i32, %c0_i32_0 : i32, i32
  }
  func.func @transform_4(%arg0: i32, %arg1: i32) -> (i32, i32) {
    %c0_i32 = arith.constant 0 : i32
    %c0_i32_0 = arith.constant 0 : i32
    %c0_i32_1 = arith.constant 0 : i32
    return %c0_i32, %c0_i32_0 : i32, i32
  }
  func.func @transform_5(%arg0: i32, %arg1: i32) -> (i32, i32, i32) {
    %c0_i32 = arith.constant 0 : i32
    %c0_i32_0 = arith.constant 0 : i32
    return %arg0, %arg1, %c0_i32 : i32, i32, i32
  }
}

</mosaic_0001>

<llo_original>
// kernel: tpu_custom_call.1
$region0: #{tpu_custom_call.1}
  #allocation0 [shape = 'u32[]', space=smem, size = 0x4, offset = 0x4, fixed_abs, tag = 'smem constant byte address 0x4 - core index']
  #allocation1 [shape = 'u32[72,128]{1,0:T(1,128)}', space=vmem, size = 0x9000, scoped, tag = 'internal scratch']
  #allocation2 [shape = 'f32[8,50]{1,0:T(8,128)}', space=vmem, size = 0x1000, scoped, tag = 'scratch operand']
  #allocation3 [shape = 's32[1]{0}', space=sflag, size = 0x4, scoped, tag = 'scratch operand']
  #allocation6 [shape = 's32[]', space=sflag, size = 0x4, offset = 0, fixed_abs, tag = 'sflag constant byte address 0x0 - dummy sync flag']
  %s0 = inlined_call_operand.vmem [shape: f32[2,8,256], index: 0, kind: input, shape index: {}]
  %s1 = inlined_call_operand.vmem [shape: f32[256,50], index: 1, kind: input, shape index: {}]
  %s2 = inlined_call_operand.vmem [shape: f32[1,8,8], index: 2, kind: input, shape index: {}]
  %s3 = inlined_call_operand.vmem [shape: f32[50,256], index: 3, kind: input, shape index: {}]
  %s4 = inlined_call_operand.vmem [shape: f32[8,50], index: 4, kind: input, shape index: {}]
  %s5 = inlined_call_operand.hbm [shape: f32[2,16,256], index: 5, kind: output, shape index: {}]
  %s6 = sld [smem:[#allocation0]]
  $region84: #{tpu_custom_call.1} parent=0
    _
  %s8 = ssub.s32 1, %s6
  %s9 = scalar_select 0, %s8, %s6
  $region1: #{tpu_custom_call.1} parent=0
    #allocation4 [shape = 'u8[16384]{0}', space=vmem, size = 0x4000, scoped, tag = 'output window, operand 0']
    #allocation5 [shape = 's32[2]{0}', space=sflag, size = 0x8, scoped, tag = 'scoped memory for tpu_custom_call.1']
    %10 = vsyncpa [#allocation5], 0
    %s11 = scalar_lea.sflag [#allocation5], 1
    %12 = vsyncpa %s11, 0
    loop: start=0, step=1, limit=6
    $region2: #{tpu_custom_call.1} parent=1 // loop_pre_header
      _
    $region3: #{tpu_custom_call.1} parent=1 // loop_header
      %s14 = sphi 0, %s18
      %p15 = scmp.ge.s32.totalorder %s14, 6
      %s21 = sphi 0, %s33
      %s22 = sphi 0, %s29
      %s23 = sphi 0, %s21
      %s24 = sphi 0, %s22
      %s25 = sphi 0, %s23
      %s26 = sphi 0, %s24
      %s42 = sphi 0, %s44
      %s45 = sphi 0, %s42
      %s46 = sphi 0, %s45
      %s62 = sphi 0, %s46
      %s66 = sphi 0, %s66
      %s68 = sphi 0, %s66
      %s69 = sphi 0, %s68
      %s83 = sphi 0, %s69
      %s87 = sphi 0, %s87
      %s89 = sphi 0, %s87
      %s90 = sphi 0, %s89
      %s104 = sphi 0, %s90
      %s108 = sphi 0, %s108
      %s110 = sphi 0, %s108
      %s111 = sphi 0, %s110
      %s125 = sphi 0, %s111
      %s129 = sphi 0, %s129
      %s131 = sphi 0, %s129
      %s132 = sphi 0, %s131
      %s146 = sphi 0, %s132
      %s154 = sphi 0, %s156
      %s157 = sphi 0, %s154
      %s158 = sphi 0, %s157
      %s174 = sphi 0, %s158
    $region4: #{tpu_custom_call.1} parent=1 // loop_header_branch
      %17 = sbr.rel (%p15) target = $region8
    $region5: #{tpu_custom_call.1} parent=1 // loop_body
      %s19 = ssub.s32 %s14, 1
      %s20 = ssub.s32 %s14, 2
      %s27 = sadd.s32 1, %s22
      %p28 = scmp.ge.s32.totalorder %s27, 2
      %s29 = scalar_select %p28, 0, %s27
      %s30 = sadd.s32 1, %s21
      %s31 = scalar_select %p28, %s30, %s21
      %p32 = scmp.ge.s32.totalorder %s31, 2
      %s33 = scalar_select %p32, 0, %s31
      %p34 = scmp.lt.s32.totalorder %s22, 0
      %s35 = scalar_select %p34, %s22, 0
      %p36 = scmp.lt.s32.totalorder %s29, 0
      %s37 = scalar_select %p36, %s29, 0
      %s38 = ssub.s32 %s21, %s33
      %s39 = ssub.s32 %s35, %s37
      %s40 = sor.u32 %s38, %s39
      %p41 = scmp.eq.s32.totalorder %s40, 0
      %s43 = sadd.s32 %s42, 1
      %s44 = scalar_select %p41, %s42, %s43
      %p47 = pneg %p41
      %p48 = scmp.eq.s32.totalorder %s14, 3
      %p49 = por %p47, %p48
      %p50 = scmp.ne.s32.totalorder %s42, %s45
      %p51 = scmp.eq.s32.totalorder %s14, 0
      %p52 = por %p50, %p51
      %p53 = scmp.ne.s32.totalorder %s42, %s45
      %p54 = scmp.eq.s32.totalorder %s19, 3
      %p55 = por %p53, %p54
      %p56 = scmp.ne.s32.totalorder %s45, %s46
      %p57 = scmp.eq.s32.totalorder %s19, 0
      %p58 = por %p56, %p57
      %p59 = scmp.ne.s32.totalorder %s45, %s46
      %p60 = scmp.eq.s32.totalorder %s20, 3
      %p61 = por %p59, %p60
      %p63 = scmp.ne.s32.totalorder %s46, %s62
      %p64 = scmp.eq.s32.totalorder %s20, 0
      %p65 = por %p63, %p64
      %s67 = sadd.s32 %s66, 1
      %p70 = scmp.eq.s32.totalorder %s14, 3
      %p71 = scmp.ne.s32.totalorder %s66, %s68
      %p72 = scmp.eq.s32.totalorder %s14, 0
      %p73 = por %p71, %p72
      %p74 = scmp.ne.s32.totalorder %s66, %s68
      %p75 = scmp.eq.s32.totalorder %s19, 3
      %p76 = por %p74, %p75
      %p77 = scmp.ne.s32.totalorder %s68, %s69
      %p78 = scmp.eq.s32.totalorder %s19, 0
      %p79 = por %p77, %p78
      %p80 = scmp.ne.s32.totalorder %s68, %s69
      %p81 = scmp.eq.s32.totalorder %s20, 3
      %p82 = por %p80, %p81
      %p84 = scmp.ne.s32.totalorder %s69, %s83
      %p85 = scmp.eq.s32.totalorder %s20, 0
      %p86 = por %p84, %p85
      %s88 = sadd.s32 %s87, 1
      %p91 = scmp.eq.s32.totalorder %s14, 3
      %p92 = scmp.ne.s32.totalorder %s87, %s89
      %p93 = scmp.eq.s32.totalorder %s14, 0
      %p94 = por %p92, %p93
      %p95 = scmp.ne.s32.totalorder %s87, %s89
      %p96 = scmp.eq.s32.totalorder %s19, 3
      %p97 = por %p95, %p96
      %p98 = scmp.ne.s32.totalorder %s89, %s90
      %p99 = scmp.eq.s32.totalorder %s19, 0
      %p100 = por %p98, %p99
      %p101 = scmp.ne.s32.totalorder %s89, %s90
      %p102 = scmp.eq.s32.totalorder %s20, 3
      %p103 = por %p101, %p102
      %p105 = scmp.ne.s32.totalorder %s90, %s104
      %p106 = scmp.eq.s32.totalorder %s20, 0
      %p107 = por %p105, %p106
      %s109 = sadd.s32 %s108, 1
      %p112 = scmp.eq.s32.totalorder %s14, 3
      %p113 = scmp.ne.s32.totalorder %s108, %s110
      %p114 = scmp.eq.s32.totalorder %s14, 0
      %p115 = por %p113, %p114
      %p116 = scmp.ne.s32.totalorder %s108, %s110
      %p117 = scmp.eq.s32.totalorder %s19, 3
      %p118 = por %p116, %p117
      %p119 = scmp.ne.s32.totalorder %s110, %s111
      %p120 = scmp.eq.s32.totalorder %s19, 0
      %p121 = por %p119, %p120
      %p122 = scmp.ne.s32.totalorder %s110, %s111
      %p123 = scmp.eq.s32.totalorder %s20, 3
      %p124 = por %p122, %p123
      %p126 = scmp.ne.s32.totalorder %s111, %s125
      %p127 = scmp.eq.s32.totalorder %s20, 0
      %p128 = por %p126, %p127
      %s130 = sadd.s32 %s129, 1
      %p133 = scmp.eq.s32.totalorder %s14, 3
      %p134 = scmp.ne.s32.totalorder %s129, %s131
      %p135 = scmp.eq.s32.totalorder %s14, 0
      %p136 = por %p134, %p135
      %p137 = scmp.ne.s32.totalorder %s129, %s131
      %p138 = scmp.eq.s32.totalorder %s19, 3
      %p139 = por %p137, %p138
      %p140 = scmp.ne.s32.totalorder %s131, %s132
      %p141 = scmp.eq.s32.totalorder %s19, 0
      %p142 = por %p140, %p141
      %p143 = scmp.ne.s32.totalorder %s131, %s132
      %p144 = scmp.eq.s32.totalorder %s20, 3
      %p145 = por %p143, %p144
      %p147 = scmp.ne.s32.totalorder %s132, %s146
      %p148 = scmp.eq.s32.totalorder %s20, 0
      %p149 = por %p147, %p148
      %s150 = ssub.s32 %s21, %s33
      %s151 = ssub.s32 %s22, %s29
      %s152 = sor.u32 %s150, %s151
      %p153 = scmp.eq.s32.totalorder %s152, 0
      %s155 = sadd.s32 %s154, 1
      %s156 = scalar_select %p153, %s154, %s155
      %p159 = pneg %p153
      %p160 = scmp.eq.s32.totalorder %s14, 3
      %p161 = por %p159, %p160
      %p162 = scmp.ne.s32.totalorder %s154, %s157
      %p163 = scmp.eq.s32.totalorder %s14, 0
      %p164 = por %p162, %p163
      %p165 = scmp.ne.s32.totalorder %s154, %s157
      %p166 = scmp.eq.s32.totalorder %s19, 3
      %p167 = por %p165, %p166
      %p168 = scmp.ne.s32.totalorder %s157, %s158
      %p169 = scmp.eq.s32.totalorder %s19, 0
      %p170 = por %p168, %p169
      %p171 = scmp.ne.s32.totalorder %s157, %s158
      %p172 = scmp.eq.s32.totalorder %s20, 3
      %p173 = por %p171, %p172
      %p175 = scmp.ne.s32.totalorder %s158, %s174
      %p176 = scmp.eq.s32.totalorder %s20, 0
      %p177 = por %p175, %p176
      %p178 = scmp.le.s32.totalorder 1, %s14
      %p179 = scmp.lt.s32.totalorder %s14, 5
      %p180 = pnand %p178, %p179
      %p181 = pneg %p180
      // Predicated region
      $region9: #{tpu_custom_call.1} parent=5 // pred_check
        _
      $region10: #{tpu_custom_call.1} parent=5 // pred_check_branch
        %183 = sbr.rel (%p180) target = $region12
      $region11: #{tpu_custom_call.1} parent=5 // pred_region
        %s184 = ssub.s32 %s14, 1
        // Predicated region
        $region13: #{tpu_custom_call.1} parent=11 // pred_check
          %p185 = pneg %p79
        $region14: #{tpu_custom_call.1} parent=11 // pred_check_branch
          %187 = sbr.rel (%p185) target = $region16
        $region15: #{tpu_custom_call.1} parent=11 // pred_region
          _
        $region16: #{tpu_custom_call.1} parent=11 // pred_fallthru
          _
        // Predicated region
        $region17: #{tpu_custom_call.1} parent=11 // pred_check
          %p188 = pneg %p100
        $region18: #{tpu_custom_call.1} parent=11 // pred_check_branch
          %190 = sbr.rel (%p188) target = $region20
        $region19: #{tpu_custom_call.1} parent=11 // pred_region
          _
        $region20: #{tpu_custom_call.1} parent=11 // pred_fallthru
          _
        // Predicated region
        $region21: #{tpu_custom_call.1} parent=11 // pred_check
          %p191 = pneg %p121
        $region22: #{tpu_custom_call.1} parent=11 // pred_check_branch
          %193 = sbr.rel (%p191) target = $region24
        $region23: #{tpu_custom_call.1} parent=11 // pred_region
          _
        $region24: #{tpu_custom_call.1} parent=11 // pred_fallthru
          _
        // Predicated region
        $region25: #{tpu_custom_call.1} parent=11 // pred_check
          %p194 = pneg %p142
        $region26: #{tpu_custom_call.1} parent=11 // pred_check_branch
          %196 = sbr.rel (%p194) target = $region28
        $region27: #{tpu_custom_call.1} parent=11 // pred_region
          _
        $region28: #{tpu_custom_call.1} parent=11 // pred_fallthru
          _
      $region12: #{tpu_custom_call.1} parent=5 // pred_fallthru
        _
      %p197 = scmp.lt.s32.totalorder %s14, 4
      // Predicated region
      $region29: #{tpu_custom_call.1} parent=5 // pred_check
        %p198 = pneg %p197
      $region30: #{tpu_custom_call.1} parent=5 // pred_check_branch
        %200 = sbr.rel (%p198) target = $region32
      $region31: #{tpu_custom_call.1} parent=5 // pred_region
        // Predicated region
        $region33: #{tpu_custom_call.1} parent=31 // pred_check
          %p201 = pneg %p52
        $region34: #{tpu_custom_call.1} parent=31 // pred_check_branch
          %203 = sbr.rel (%p201) target = $region36
        $region35: #{tpu_custom_call.1} parent=31 // pred_region
          %p204 = scmp.lt.s32.totalorder %s22, 0
          %s205 = scalar_select %p204, %s22, 0
          %p206 = scmp.lt.s32.totalorder %s21, 1
          %s207 = scalar_select %p206, %s21, 1
          %p208 = scmp.lt.s32.totalorder %s205, 0
          %s209 = scalar_select %p208, %s205, 0
          %s210 = smul.addr %s209, 2
          %s211 = smul.addr %s207, 2
          %s212 = sadd.s32 %s210, %s211
          %s213 = smul.addr %s212, 8
          %s214 = scalar_lea.vmem %s0, %s213
          %p215 = scmp.lt.s32.totalorder %s22, 0
          %s216 = scalar_select %p215, %s22, 0
        $region36: #{tpu_custom_call.1} parent=31 // pred_fallthru
          _
      $region32: #{tpu_custom_call.1} parent=5 // pred_fallthru
        _
      %p217 = scmp.le.s32.totalorder 1, %s14
      %p218 = scmp.lt.s32.totalorder %s14, 5
      %p219 = pnand %p217, %p218
      %p220 = pneg %p219
      // Predicated region
      $region37: #{tpu_custom_call.1} parent=5 // pred_check
        _
      $region38: #{tpu_custom_call.1} parent=5 // pred_check_branch
        %222 = sbr.rel (%p219) target = $region40
      $region39: #{tpu_custom_call.1} parent=5 // pred_region
        %s223 = ssub.s32 %s14, 1
        %p224 = scmp.lt.s32.totalorder %s24, 0
        %s225 = scalar_select %p224, %s24, 0
        %p226 = scmp.lt.s32.totalorder %s23, 1
        %s227 = scalar_select %p226, %s23, 1
        %p228 = scmp.lt.s32.totalorder %s225, 0
        %s229 = scalar_select %p228, %s225, 0
        %s230 = smul.addr %s229, 2
        %s231 = smul.addr %s227, 2
        %s232 = sadd.s32 %s230, %s231
        %s233 = smul.addr %s232, 8
        %s234 = scalar_lea.vmem %s0, %s233
        %p235 = pneg %p58
        %p236 = pneg %p55
        %p237 = pneg %p79
        %p238 = pneg %p76
        %p239 = pneg %p100
        %p240 = pneg %p97
        %p241 = pneg %p121
        %p242 = pneg %p118
        %p243 = pneg %p142
        %p244 = pneg %p139
        %p245 = pneg %p170
        %p246 = pneg %p167
        %s247 = sand.u32 %s157, 1
        %s248 = scalar_lea.sflag [#allocation5], %s247
        %s249 = sand.u32 %s157, 1
        %s250 = smul.addr %s249, 16
        %s251 = scalar_lea.vmem [#allocation4], %s250
        %p252 = scmp.lt.s32.totalorder %s24, 0
        %s253 = scalar_select %p252, %s24, 0
        %p254 = scmp.lt.s32.totalorder %s23, 1
        %s255 = scalar_select %p254, %s23, 1
        %p256 = scmp.lt.s32.totalorder %s253, 0
        %s257 = scalar_select %p256, %s253, 0
        %s258 = smul.addr %s257, 2
        %s259 = smul.addr %s255, 2
        %s260 = sadd.s32 %s258, %s259
        %s261 = smul.addr %s260, 8
        %s262 = scalar_lea.vmem %s0, %s261
        %p263 = scmp.lt.s32.totalorder %s24, 0
        %s264 = scalar_select %p263, %s24, 0
        %p265 = scmp.eq.s32.totalorder %s24, 0
        // Predicated region
        $region41: #{tpu_custom_call.1} parent=39 // pred_check
          %p266 = pneg %p265
        $region42: #{tpu_custom_call.1} parent=39 // pred_check_branch
          %268 = sbr.rel (%p266) target = $region44
        $region43: #{tpu_custom_call.1} parent=39 // pred_region
          %vm269 = vcmask 408576
          %270 = vst.msk [vmem:[#allocation2] sm:$0xff] %vm269, 0.0
        $region44: #{tpu_custom_call.1} parent=39 // pred_fallthru
          _
        %p271 = scmp.lt.s32.totalorder %s24, 1
        // Predicated region
        $region45: #{tpu_custom_call.1} parent=39 // pred_check
          %p272 = pneg %p271
        $region46: #{tpu_custom_call.1} parent=39 // pred_check_branch
          %274 = sbr.rel (%p272) target = $region48
        $region47: #{tpu_custom_call.1} parent=39 // pred_region
          // Predicated region
          $region49: #{tpu_custom_call.1} parent=47 // pred_check
            _
          $region50: #{tpu_custom_call.1} parent=47 // pred_check_branch
            %276 = sbr.rel (0) target = $region52
          $region51: #{tpu_custom_call.1} parent=47 // pred_region
            loop: start=0, step=1, limit=1
            $region53: #{tpu_custom_call.1} parent=51 // loop_pre_header
              _
            $region54: #{tpu_custom_call.1} parent=51 // loop_header
              %s278 = sphi 0, %s282
              %p279 = scmp.ge.s32.totalorder %s278, 1
              %s283 = sphi %s262, %s262
              %s284 = sphi %s251, %s251
            $region55: #{tpu_custom_call.1} parent=51 // loop_header_branch
              %281 = sbr.rel (%p279) target = $region59
            $region56: #{tpu_custom_call.1} parent=51 // loop_body
              %v285 = vld [vmem:[%s283] sm:$0xff]
              %286 = vst [vmem:[%s284] sm:$0xff] %v285
              %v287 = vld [vmem:[%s283 + $0x8] sm:$0xff]
              %288 = vst [vmem:[%s284 + $0x8] sm:$0xff] %v287
            $region57: #{tpu_custom_call.1} parent=51 // loop_footer
              %s282 = sadd.s32 1, %s278
            $region58: #{tpu_custom_call.1} parent=51 // loop_footer_branch
              %277 = sbr.rel target = $region54
            $region59: #{tpu_custom_call.1} parent=51 // loop_exit
              _
          $region52: #{tpu_custom_call.1} parent=47 // pred_fallthru
            _
          // Predicated region
          $region60: #{tpu_custom_call.1} parent=47 // pred_check
            _
          $region61: #{tpu_custom_call.1} parent=47 // pred_check_branch
            %290 = sbr.rel target = $region63
          $region62: #{tpu_custom_call.1} parent=47 // pred_region
            _
          $region63: #{tpu_custom_call.1} parent=47 // pred_fallthru
            _
          // Predicated region
          $region64: #{tpu_custom_call.1} parent=47 // pred_check
            _
          $region65: #{tpu_custom_call.1} parent=47 // pred_check_branch
            %293 = sbr.rel (0) target = $region67
          $region66: #{tpu_custom_call.1} parent=47 // pred_region
            %294 = vsyncadd [#allocation3], 256
          $region67: #{tpu_custom_call.1} parent=47 // pred_fallthru
            _
          %v295 = vld [vmem:[%s262] sm:$0xff]
          %v296 = vld [vmem:[%s262 + $0x8] sm:$0xff]
          %v297 = vld [vmem:[%s1] sm:$0xff]
          %v298 = vld [vmem:[%s1 + $0x8] sm:$0xff]
          %v299 = vld [vmem:[%s1 + $0x10] sm:$0xff]
          %v300 = vld [vmem:[%s1 + $0x18] sm:$0xff]
          %v301 = vld [vmem:[%s1 + $0x20] sm:$0xff]
          %v302 = vld [vmem:[%s1 + $0x28] sm:$0xff]
          %v303 = vld [vmem:[%s1 + $0x30] sm:$0xff]
          %v304 = vld [vmem:[%s1 + $0x38] sm:$0xff]
          %v305 = vld [vmem:[%s1 + $0x40] sm:$0xff]
          %v306 = vld [vmem:[%s1 + $0x48] sm:$0xff]
          %v307 = vld [vmem:[%s1 + $0x50] sm:$0xff]
          %v308 = vld [vmem:[%s1 + $0x58] sm:$0xff]
          %v309 = vld [vmem:[%s1 + $0x60] sm:$0xff]
          %v310 = vld [vmem:[%s1 + $0x68] sm:$0xff]
          %v311 = vld [vmem:[%s1 + $0x70] sm:$0xff]
          %v312 = vld [vmem:[%s1 + $0x78] sm:$0xff]
          %v313 = vld [vmem:[%s1 + $0x80] sm:$0xff]
          %v314 = vld [vmem:[%s1 + $0x88] sm:$0xff]
          %v315 = vld [vmem:[%s1 + $0x90] sm:$0xff]
          %v316 = vld [vmem:[%s1 + $0x98] sm:$0xff]
          %v317 = vld [vmem:[%s1 + $0xa0] sm:$0xff]
          %v318 = vld [vmem:[%s1 + $0xa8] sm:$0xff]
          %v319 = vld [vmem:[%s1 + $0xb0] sm:$0xff]
          %v320 = vld [vmem:[%s1 + $0xb8] sm:$0xff]
          %v321 = vld [vmem:[%s1 + $0xc0] sm:$0xff]
          %v322 = vld [vmem:[%s1 + $0xc8] sm:$0xff]
          %v323 = vld [vmem:[%s1 + $0xd0] sm:$0xff]
          %v324 = vld [vmem:[%s1 + $0xd8] sm:$0xff]
          %v325 = vld [vmem:[%s1 + $0xe0] sm:$0xff]
          %v326 = vld [vmem:[%s1 + $0xe8] sm:$0xff]
          %v327 = vld [vmem:[%s1 + $0xf0] sm:$0xff]
          %v328 = vld [vmem:[%s1 + $0xf8] sm:$0xff]
          %329 = vmatpush.msra.mxu0 %v312
          %330 = vmatpush.msra.mxu0 %v311
          %331 = vmatpush.msra.mxu0 %v310
          %332 = vmatpush.msra.mxu0 %v309
          %333 = vmatpush.msra.mxu0 %v308
          %334 = vmatpush.msra.mxu0 %v307
          %335 = vmatpush.msra.mxu0 %v306
          %336 = vmatpush.msra.mxu0 %v305
          %337 = vmatpush.msra.mxu0 %v304
          %338 = vmatpush.msra.mxu0 %v303
          %339 = vmatpush.msra.mxu0 %v302
          %340 = vmatpush.msra.mxu0 %v301
          %341 = vmatpush.msra.mxu0 %v300
          %342 = vmatpush.msra.mxu0 %v299
          %343 = vmatpush.msra.mxu0 %v298
          %344 = vmatpush.msra.mxu0 %v297
          %345 = vmatmul.f32.gmra.mxu0 %v295
          %v346 = vpop.f32.mrf.mxu0
          %v347 = vadd.f32 0.0, %v346
          %348 = vdwg.mxu0
          %349 = vmatpush.msra.mxu0 %v328
          %350 = vmatpush.msra.mxu0 %v327
          %351 = vmatpush.msra.mxu0 %v326
          %352 = vmatpush.msra.mxu0 %v325
          %353 = vmatpush.msra.mxu0 %v324
          %354 = vmatpush.msra.mxu0 %v323
          %355 = vmatpush.msra.mxu0 %v322
          %356 = vmatpush.msra.mxu0 %v321
          %357 = vmatpush.msra.mxu0 %v320
          %358 = vmatpush.msra.mxu0 %v319
          %359 = vmatpush.msra.mxu0 %v318
          %360 = vmatpush.msra.mxu0 %v317
          %361 = vmatpush.msra.mxu0 %v316
          %362 = vmatpush.msra.mxu0 %v315
          %363 = vmatpush.msra.mxu0 %v314
          %364 = vmatpush.msra.mxu0 %v313
          %365 = vmatmul.f32.gmra.mxu0 %v296
          %v366 = vpop.f32.mrf.mxu0
          %v367 = vadd.f32 %v347, %v366
          %368 = vdwg.mxu0
          %s369 = smul.u32 %s24, 8
          %s370 = scalar_lea.vmem %s2, %s369
          %v371 = vld [vmem:[%s370] sm:$0xff]
          %v372 = vld [vmem:[#allocation2] sm:$0xff]
          %vm373 = vcmask 64512
          %v375 = vsel %vm373, %v371, 0
          %377 = vmatpush.msra.mxu0 0.0
          %378 = vmatpush.msra.mxu0 0.0
          %379 = vmatpush.msra.mxu0 0.0
          %380 = vmatpush.msra.mxu0 0.0
          %381 = vmatpush.msra.mxu0 0.0
          %382 = vmatpush.msra.mxu0 0.0
          %383 = vmatpush.msra.mxu0 0.0
          %384 = vmatpush.msra.mxu0 0.0
          %385 = vmatpush.msra.mxu0 0.0
          %386 = vmatpush.msra.mxu0 0.0
          %387 = vmatpush.msra.mxu0 0.0
          %388 = vmatpush.msra.mxu0 0.0
          %389 = vmatpush.msra.mxu0 0.0
          %390 = vmatpush.msra.mxu0 0.0
          %391 = vmatpush.msra.mxu0 0.0
          %392 = vmatpush.msra.mxu0 %v367
          %393 = vmatmul.f32.gmra.mxu0 %v375
          %v394 = vpop.f32.mrf.mxu0
          %v395 = vadd.f32 0.0, %v394
          %396 = vdwg.mxu0
          %v397 = vadd.f32 %v372, %v395
          %vm398 = vcmask 408576
          %399 = vst.msk [vmem:[#allocation2] sm:$0xff] %vm398, %v397
          %s400 = smul.u32 8, 1
          %s401 = smul.u32 %s400, 1
          %s402 = smul.u32 %s401, 2
          %s403 = sshll.u32 %s402, 4
          %404 = dma.done [#allocation3], %s403
        $region48: #{tpu_custom_call.1} parent=39 // pred_fallthru
          _
        %p405 = scmp.ge.s32.totalorder %s24, 1
        // Predicated region
        $region68: #{tpu_custom_call.1} parent=39 // pred_check
          %p406 = pneg %p405
        $region69: #{tpu_custom_call.1} parent=39 // pred_check_branch
          %408 = sbr.rel (%p406) target = $region71
        $region70: #{tpu_custom_call.1} parent=39 // pred_region
          %s409 = ssub.s32 %s24, 1
          %s410 = smul.u32 %s409, 8
          %s411 = scalar_lea.vmem [#allocation2], %s410
          %v412 = vld [vmem:[%s411] sm:$0xff]
          %s413 = scalar_lea.vmem %s4, %s410
          %v414 = vld [vmem:[%s413] sm:$0xff]
          %v415 = vadd.f32 %v412, %v414
          %v416 = vmax.f32 %v415, 0.0
          %v417 = vld [vmem:[%s3] sm:$0xff]
          %v418 = vld [vmem:[%s3 + $0x8] sm:$0xff]
          %v419 = vld [vmem:[%s3 + $0x10] sm:$0xff]
          %v420 = vld [vmem:[%s3 + $0x18] sm:$0xff]
          %v421 = vld [vmem:[%s3 + $0x20] sm:$0xff]
          %v422 = vld [vmem:[%s3 + $0x28] sm:$0xff]
          %v423 = vld [vmem:[%s3 + $0x30] sm:$0xff]
          %v424 = vld [vmem:[%s3 + $0x38] sm:$0xff]
          %v425 = vld [vmem:[%s3 + $0x40] sm:$0xff]
          %v426 = vld [vmem:[%s3 + $0x48] sm:$0xff]
          %v427 = vld [vmem:[%s3 + $0x50] sm:$0xff]
          %v428 = vld [vmem:[%s3 + $0x58] sm:$0xff]
          %v429 = vld [vmem:[%s3 + $0x60] sm:$0x3]
          %v430 = vld [vmem:[%s3 + $0x68] sm:$0x3]
          %vm431 = vcmask 408576
          %v433 = vsel %vm431, %v416, 0
          %vm435 = vcmask 1041408
          %v437 = vsel %vm435, %v429, 0
          %v440 = vsel %vm435, %v430, 0
          %442 = vmatpush.msra.mxu0 0.0
          %443 = vmatpush.msra.mxu0 0.0
          %444 = vmatpush.msra.mxu0 0.0
          %445 = vmatpush.msra.mxu0 0.0
          %446 = vmatpush.msra.mxu0 0.0
          %447 = vmatpush.msra.mxu0 0.0
          %448 = vmatpush.msra.mxu0 0.0
          %449 = vmatpush.msra.mxu0 0.0
          %450 = vmatpush.msra.mxu0 0.0
          %451 = vmatpush.msra.mxu0 %v437
          %452 = vmatpush.msra.mxu0 %v427
          %453 = vmatpush.msra.mxu0 %v425
          %454 = vmatpush.msra.mxu0 %v423
          %455 = vmatpush.msra.mxu0 %v421
          %456 = vmatpush.msra.mxu0 %v419
          %457 = vmatpush.msra.mxu0 %v417
          %458 = vmatmul.f32.gmra.mxu0 %v433
          %v459 = vpop.f32.mrf.mxu0
          %v460 = vadd.f32 0.0, %v459
          %461 = vdwg.mxu0
          %462 = vmatpush.msra.mxu0 0.0
          %463 = vmatpush.msra.mxu0 0.0
          %464 = vmatpush.msra.mxu0 0.0
          %465 = vmatpush.msra.mxu0 0.0
          %466 = vmatpush.msra.mxu0 0.0
          %467 = vmatpush.msra.mxu0 0.0
          %468 = vmatpush.msra.mxu0 0.0
          %469 = vmatpush.msra.mxu0 0.0
          %470 = vmatpush.msra.mxu0 0.0
          %471 = vmatpush.msra.mxu0 %v440
          %472 = vmatpush.msra.mxu0 %v428
          %473 = vmatpush.msra.mxu0 %v426
          %474 = vmatpush.msra.mxu0 %v424
          %475 = vmatpush.msra.mxu0 %v422
          %476 = vmatpush.msra.mxu0 %v420
          %477 = vmatpush.msra.mxu0 %v418
          %478 = vmatmul.f32.gmra.mxu0 %v433
          %v479 = vpop.f32.mrf.mxu0
          %v480 = vadd.f32 0.0, %v479
          %481 = vdwg.mxu0
          %482 = vst [vmem:[%s251] sm:$0xff] %v460
          %483 = vst [vmem:[%s251 + $0x8] sm:$0xff] %v480
        $region71: #{tpu_custom_call.1} parent=39 // pred_fallthru
          _
        %s484 = sand.u32 %s157, 1
        %s485 = scalar_lea.sflag [#allocation5], %s484
        %s486 = sand.u32 %s157, 1
        %s487 = smul.addr %s486, 16
        %s488 = scalar_lea.vmem [#allocation4], %s487
        // Predicated region
        $region72: #{tpu_custom_call.1} parent=39 // pred_check
          %p489 = pneg %p167
        $region73: #{tpu_custom_call.1} parent=39 // pred_check_branch
          %491 = sbr.rel (%p489) target = $region75
        $region74: #{tpu_custom_call.1} parent=39 // pred_region
          %493 = vsyncadd %s485, 0
          %s494 = smul.addr %s24, 2
          %s495 = smul.addr %s23, 4
          %s496 = sadd.s32 %s494, %s495
          %s497 = smul.addr %s496, 8
          %s498 = scalar_lea.hbm %s5, %s497
          %s500 = sshll.u32 %s488, 4
          %s501 = int_to_ptr.vmem [resolvable:$true] %s500
          %s502 = sshll.u32 %s498, 4
          %s503 = int_to_ptr.hbm [resolvable:$true] %s502
          %505 = dma.vmem_to_hbm [thread:$0]  %s501, 256, %s503, %s485
        $region75: #{tpu_custom_call.1} parent=39 // pred_fallthru
          _
      $region40: #{tpu_custom_call.1} parent=5 // pred_fallthru
        _
      %p506 = scmp.le.s32.totalorder 2, %s14
      // Predicated region
      $region76: #{tpu_custom_call.1} parent=5 // pred_check
        %p507 = pneg %p506
      $region77: #{tpu_custom_call.1} parent=5 // pred_check_branch
        %509 = sbr.rel (%p507) target = $region79
      $region78: #{tpu_custom_call.1} parent=5 // pred_region
        %s510 = ssub.s32 %s14, 2
        // Predicated region
        $region80: #{tpu_custom_call.1} parent=78 // pred_check
          %p511 = pneg %p173
        $region81: #{tpu_custom_call.1} parent=78 // pred_check_branch
          %513 = sbr.rel (%p511) target = $region83
        $region82: #{tpu_custom_call.1} parent=78 // pred_region
          %s514 = sand.u32 %s158, 1
          %s515 = scalar_lea.sflag [#allocation5], %s514
          %s516 = sand.u32 %s158, 1
          %s517 = smul.addr %s516, 16
          %s518 = scalar_lea.vmem [#allocation4], %s517
          %520 = dma.done %s515, 256
        $region83: #{tpu_custom_call.1} parent=78 // pred_fallthru
          _
      $region79: #{tpu_custom_call.1} parent=5 // pred_fallthru
        _
    $region6: #{tpu_custom_call.1} parent=1 // loop_footer
      %s18 = sadd.s32 1, %s14
    $region7: #{tpu_custom_call.1} parent=1 // loop_footer_branch
      %13 = sbr.rel target = $region3
    $region8: #{tpu_custom_call.1} parent=1 // loop_exit
      _
    %521 = vsyncpa [#allocation5], 1
    %s522 = scalar_lea.sflag [#allocation5], 1
    %523 = vsyncpa %s522, 1
  %524 = vsyncmov [#allocation3]
  %s525 = vpop.sfrf %524
  %p526 = scmp.eq.s32.totalorder %s525, 0
  %p527 = pneg %p526
  %529 = shalt.err (%p527)

// kernel: tpu_custom_call.1
$region0: #{tpu_custom_call.1}
  #allocation0 [shape = 'u32[]', space=smem, size = 0x4, offset = 0x4, fixed_abs, tag = 'smem constant byte address 0x4 - core index']
  #allocation1 [shape = 'u32[72,128]{1,0:T(1,128)}', space=vmem, size = 0x9000, scoped, tag = 'internal scratch']
  #allocation2 [shape = 'f32[8,50]{1,0:T(8,128)}', space=vmem, size = 0x1000, scoped, tag = 'scratch operand']
  #allocation3 [shape = 's32[1]{0}', space=sflag, size = 0x4, scoped, tag = 'scratch operand']
  #allocation6 [shape = 's32[]', space=sflag, size = 0x4, offset = 0, fixed_abs, tag = 'sflag constant byte address 0x0 - dummy sync flag']
  %s0 = inlined_call_operand.vmem [shape: f32[2,8,256], index: 0, kind: input, shape index: {}]
  %s1 = inlined_call_operand.vmem [shape: f32[256,50], index: 1, kind: input, shape index: {}]
  %s2 = inlined_call_operand.vmem [shape: f32[1,8,8], index: 2, kind: input, shape index: {}]
  %s3 = inlined_call_operand.vmem [shape: f32[50,256], index: 3, kind: input, shape index: {}]
  %s4 = inlined_call_operand.vmem [shape: f32[8,50], index: 4, kind: input, shape index: {}]
  %s5 = inlined_call_operand.hbm [shape: f32[2,16,256], index: 5, kind: output, shape index: {}]
  %s6 = sld [smem:[#allocation0]]
  $region84: #{tpu_custom_call.1} parent=0
    _
  %s8 = ssub.s32 1, %s6
  %s9 = scalar_select 0, %s8, %s6
  $region1: #{tpu_custom_call.1} parent=0
    #allocation4 [shape = 'u8[16384]{0}', space=vmem, size = 0x4000, scoped, tag = 'output window, operand 0']
    #allocation5 [shape = 's32[2]{0}', space=sflag, size = 0x8, scoped, tag = 'scoped memory for tpu_custom_call.1']
    %10 = vsyncpa [#allocation5], 0
    %s11 = scalar_lea.sflag [#allocation5], 1
    %12 = vsyncpa %s11, 0
    loop: start=0, step=1, limit=6
    $region2: #{tpu_custom_call.1} parent=1 // loop_pre_header
      _
    $region3: #{tpu_custom_call.1} parent=1 // loop_header
      %s14 = sphi 0, %s18
      %p15 = scmp.ge.s32.totalorder %s14, 6
      %s21 = sphi 0, %s33
      %s22 = sphi 0, %s29
      %s23 = sphi 0, %s21
      %s24 = sphi 0, %s22
      %s25 = sphi 0, %s23
      %s26 = sphi 0, %s24
      %s42 = sphi 0, %s44
      %s45 = sphi 0, %s42
      %s46 = sphi 0, %s45
      %s62 = sphi 0, %s46
      %s66 = sphi 0, %s66
      %s68 = sphi 0, %s66
      %s69 = sphi 0, %s68
      %s83 = sphi 0, %s69
      %s87 = sphi 0, %s87
      %s89 = sphi 0, %s87
      %s90 = sphi 0, %s89
      %s104 = sphi 0, %s90
      %s108 = sphi 0, %s108
      %s110 = sphi 0, %s108
      %s111 = sphi 0, %s110
      %s125 = sphi 0, %s111
      %s129 = sphi 0, %s129
      %s131 = sphi 0, %s129
      %s132 = sphi 0, %s131
      %s146 = sphi 0, %s132
      %s154 = sphi 0, %s156
      %s157 = sphi 0, %s154
      %s158 = sphi 0, %s157
      %s174 = sphi 0, %s158
    $region4: #{tpu_custom_call.1} parent=1 // loop_header_branch
      %17 = sbr.rel (%p15) target = $region8
    $region5: #{tpu_custom_call.1} parent=1 // loop_body
      %s19 = ssub.s32 %s14, 1
      %s20 = ssub.s32 %s14, 2
      %s27 = sadd.s32 1, %s22
      %p28 = scmp.ge.s32.totalorder %s27, 2
      %s29 = scalar_select %p28, 0, %s27
      %s30 = sadd.s32 1, %s21
      %s31 = scalar_select %p28, %s30, %s21
      %p32 = scmp.ge.s32.totalorder %s31, 2
      %s33 = scalar_select %p32, 0, %s31
      %p34 = scmp.lt.s32.totalorder %s22, 0
      %s35 = scalar_select %p34, %s22, 0
      %p36 = scmp.lt.s32.totalorder %s29, 0
      %s37 = scalar_select %p36, %s29, 0
      %s38 = ssub.s32 %s21, %s33
      %s39 = ssub.s32 %s35, %s37
      %s40 = sor.u32 %s38, %s39
      %p41 = scmp.eq.s32.totalorder %s40, 0
      %s43 = sadd.s32 %s42, 1
      %s44 = scalar_select %p41, %s42, %s43
      %p47 = pneg %p41
      %p48 = scmp.eq.s32.totalorder %s14, 3
      %p49 = por %p47, %p48
      %p50 = scmp.ne.s32.totalorder %s42, %s45
      %p51 = scmp.eq.s32.totalorder %s14, 0
      %p52 = por %p50, %p51
      %p53 = scmp.ne.s32.totalorder %s42, %s45
      %p54 = scmp.eq.s32.totalorder %s19, 3
      %p55 = por %p53, %p54
      %p56 = scmp.ne.s32.totalorder %s45, %s46
      %p57 = scmp.eq.s32.totalorder %s19, 0
      %p58 = por %p56, %p57
      %p59 = scmp.ne.s32.totalorder %s45, %s46
      %p60 = scmp.eq.s32.totalorder %s20, 3
      %p61 = por %p59, %p60
      %p63 = scmp.ne.s32.totalorder %s46, %s62
      %p64 = scmp.eq.s32.totalorder %s20, 0
      %p65 = por %p63, %p64
      %s67 = sadd.s32 %s66, 1
      %p70 = scmp.eq.s32.totalorder %s14, 3
      %p71 = scmp.ne.s32.totalorder %s66, %s68
      %p72 = scmp.eq.s32.totalorder %s14, 0
      %p73 = por %p71, %p72
      %p74 = scmp.ne.s32.totalorder %s66, %s68
      %p75 = scmp.eq.s32.totalorder %s19, 3
      %p76 = por %p74, %p75
      %p77 = scmp.ne.s32.totalorder %s68, %s69
      %p78 = scmp.eq.s32.totalorder %s19, 0
      %p79 = por %p77, %p78
      %p80 = scmp.ne.s32.totalorder %s68, %s69
      %p81 = scmp.eq.s32.totalorder %s20, 3
      %p82 = por %p80, %p81
      %p84 = scmp.ne.s32.totalorder %s69, %s83
      %p85 = scmp.eq.s32.totalorder %s20, 0
      %p86 = por %p84, %p85
      %s88 = sadd.s32 %s87, 1
      %p91 = scmp.eq.s32.totalorder %s14, 3
      %p92 = scmp.ne.s32.totalorder %s87, %s89
      %p93 = scmp.eq.s32.totalorder %s14, 0
      %p94 = por %p92, %p93
      %p95 = scmp.ne.s32.totalorder %s87, %s89
      %p96 = scmp.eq.s32.totalorder %s19, 3
      %p97 = por %p95, %p96
      %p98 = scmp.ne.s32.totalorder %s89, %s90
      %p99 = scmp.eq.s32.totalorder %s19, 0
      %p100 = por %p98, %p99
      %p101 = scmp.ne.s32.totalorder %s89, %s90
      %p102 = scmp.eq.s32.totalorder %s20, 3
      %p103 = por %p101, %p102
      %p105 = scmp.ne.s32.totalorder %s90, %s104
      %p106 = scmp.eq.s32.totalorder %s20, 0
      %p107 = por %p105, %p106
      %s109 = sadd.s32 %s108, 1
      %p112 = scmp.eq.s32.totalorder %s14, 3
      %p113 = scmp.ne.s32.totalorder %s108, %s110
      %p114 = scmp.eq.s32.totalorder %s14, 0
      %p115 = por %p113, %p114
      %p116 = scmp.ne.s32.totalorder %s108, %s110
      %p117 = scmp.eq.s32.totalorder %s19, 3
      %p118 = por %p116, %p117
      %p119 = scmp.ne.s32.totalorder %s110, %s111
      %p120 = scmp.eq.s32.totalorder %s19, 0
      %p121 = por %p119, %p120
      %p122 = scmp.ne.s32.totalorder %s110, %s111
      %p123 = scmp.eq.s32.totalorder %s20, 3
      %p124 = por %p122, %p123
      %p126 = scmp.ne.s32.totalorder %s111, %s125
      %p127 = scmp.eq.s32.totalorder %s20, 0
      %p128 = por %p126, %p127
      %s130 = sadd.s32 %s129, 1
      %p133 = scmp.eq.s32.totalorder %s14, 3
      %p134 = scmp.ne.s32.totalorder %s129, %s131
      %p135 = scmp.eq.s32.totalorder %s14, 0
      %p136 = por %p134, %p135
      %p137 = scmp.ne.s32.totalorder %s129, %s131
      %p138 = scmp.eq.s32.totalorder %s19, 3
      %p139 = por %p137, %p138
      %p140 = scmp.ne.s32.totalorder %s131, %s132
      %p141 = scmp.eq.s32.totalorder %s19, 0
      %p142 = por %p140, %p141
      %p143 = scmp.ne.s32.totalorder %s131, %s132
      %p144 = scmp.eq.s32.totalorder %s20, 3
      %p145 = por %p143, %p144
      %p147 = scmp.ne.s32.totalorder %s132, %s146
      %p148 = scmp.eq.s32.totalorder %s20, 0
      %p149 = por %p147, %p148
      %s150 = ssub.s32 %s21, %s33
      %s151 = ssub.s32 %s22, %s29
      %s152 = sor.u32 %s150, %s151
      %p153 = scmp.eq.s32.totalorder %s152, 0
      %s155 = sadd.s32 %s154, 1
      %s156 = scalar_select %p153, %s154, %s155
      %p159 = pneg %p153
      %p160 = scmp.eq.s32.totalorder %s14, 3
      %p161 = por %p159, %p160
      %p162 = scmp.ne.s32.totalorder %s154, %s157
      %p163 = scmp.eq.s32.totalorder %s14, 0
      %p164 = por %p162, %p163
      %p165 = scmp.ne.s32.totalorder %s154, %s157
      %p166 = scmp.eq.s32.totalorder %s19, 3
      %p167 = por %p165, %p166
      %p168 = scmp.ne.s32.totalorder %s157, %s158
      %p169 = scmp.eq.s32.totalorder %s19, 0
      %p170 = por %p168, %p169
      %p171 = scmp.ne.s32.totalorder %s157, %s158
      %p172 = scmp.eq.s32.totalorder %s20, 3
      %p173 = por %p171, %p172
      %p175 = scmp.ne.s32.totalorder %s158, %s174
      %p176 = scmp.eq.s32.totalorder %s20, 0
      %p177 = por %p175, %p176
      %p178 = scmp.le.s32.totalorder 1, %s14
      %p179 = scmp.lt.s32.totalorder %s14, 5
      %p180 = pnand %p178, %p179
      %p181 = pneg %p180
      // Predicated region
      $region9: #{tpu_custom_call.1} parent=5 // pred_check
        _
      $region10: #{tpu_custom_call.1} parent=5 // pred_check_branch
        %183 = sbr.rel (%p180) target = $region12
      $region11: #{tpu_custom_call.1} parent=5 // pred_region
        %s184 = ssub.s32 %s14, 1
        // Predicated region
        $region13: #{tpu_custom_call.1} parent=11 // pred_check
          %p185 = pneg %p79
        $region14: #{tpu_custom_call.1} parent=11 // pred_check_branch
          %187 = sbr.rel (%p185) target = $region16
        $region15: #{tpu_custom_call.1} parent=11 // pred_region
          _
        $region16: #{tpu_custom_call.1} parent=11 // pred_fallthru
          _
        // Predicated region
        $region17: #{tpu_custom_call.1} parent=11 // pred_check
          %p188 = pneg %p100
        $region18: #{tpu_custom_call.1} parent=11 // pred_check_branch
          %190 = sbr.rel (%p188) target = $region20
        $region19: #{tpu_custom_call.1} parent=11 // pred_region
          _
        $region20: #{tpu_custom_call.1} parent=11 // pred_fallthru
          _
        // Predicated region
        $region21: #{tpu_custom_call.1} parent=11 // pred_check
          %p191 = pneg %p121
        $region22: #{tpu_custom_call.1} parent=11 // pred_check_branch
          %193 = sbr.rel (%p191) target = $region24
        $region23: #{tpu_custom_call.1} parent=11 // pred_region
          _
        $region24: #{tpu_custom_call.1} parent=11 // pred_fallthru
          _
        // Predicated region
        $region25: #{tpu_custom_call.1} parent=11 // pred_check
          %p194 = pneg %p142
        $region26: #{tpu_custom_call.1} parent=11 // pred_check_branch
          %196 = sbr.rel (%p194) target = $region28
        $region27: #{tpu_custom_call.1} parent=11 // pred_region
          _
        $region28: #{tpu_custom_call.1} parent=11 // pred_fallthru
          _
      $region12: #{tpu_custom_call.1} parent=5 // pred_fallthru
        _
      %p197 = scmp.lt.s32.totalorder %s14, 4
      // Predicated region
      $region29: #{tpu_custom_call.1} parent=5 // pred_check
        %p198 = pneg %p197
      $region30: #{tpu_custom_call.1} parent=5 // pred_check_branch
        %200 = sbr.rel (%p198) target = $region32
      $region31: #{tpu_custom_call.1} parent=5 // pred_region
        // Predicated region
        $region33: #{tpu_custom_call.1} parent=31 // pred_check
          %p201 = pneg %p52
        $region34: #{tpu_custom_call.1} parent=31 // pred_check_branch
          %203 = sbr.rel (%p201) target = $region36
        $region35: #{tpu_custom_call.1} parent=31 // pred_region
          %p204 = scmp.lt.s32.totalorder %s22, 0
          %s205 = scalar_select %p204, %s22, 0
          %p206 = scmp.lt.s32.totalorder %s21, 1
          %s207 = scalar_select %p206, %s21, 1
          %p208 = scmp.lt.s32.totalorder %s205, 0
          %s209 = scalar_select %p208, %s205, 0
          %s210 = smul.addr %s209, 2
          %s211 = smul.addr %s207, 2
          %s212 = sadd.s32 %s210, %s211
          %s213 = smul.addr %s212, 8
          %s214 = scalar_lea.vmem %s0, %s213
          %p215 = scmp.lt.s32.totalorder %s22, 0
          %s216 = scalar_select %p215, %s22, 0
        $region36: #{tpu_custom_call.1} parent=31 // pred_fallthru
          _
      $region32: #{tpu_custom_call.1} parent=5 // pred_fallthru
        _
      %p217 = scmp.le.s32.totalorder 1, %s14
      %p218 = scmp.lt.s32.totalorder %s14, 5
      %p219 = pnand %p217, %p218
      %p220 = pneg %p219
      // Predicated region
      $region37: #{tpu_custom_call.1} parent=5 // pred_check
        _
      $region38: #{tpu_custom_call.1} parent=5 // pred_check_branch
        %222 = sbr.rel (%p219) target = $region40
      $region39: #{tpu_custom_call.1} parent=5 // pred_region
        %s223 = ssub.s32 %s14, 1
        %p224 = scmp.lt.s32.totalorder %s24, 0
        %s225 = scalar_select %p224, %s24, 0
        %p226 = scmp.lt.s32.totalorder %s23, 1
        %s227 = scalar_select %p226, %s23, 1
        %p228 = scmp.lt.s32.totalorder %s225, 0
        %s229 = scalar_select %p228, %s225, 0
        %s230 = smul.addr %s229, 2
        %s231 = smul.addr %s227, 2
        %s232 = sadd.s32 %s230, %s231
        %s233 = smul.addr %s232, 8
        %s234 = scalar_lea.vmem %s0, %s233
        %p235 = pneg %p58
        %p236 = pneg %p55
        %p237 = pneg %p79
        %p238 = pneg %p76
        %p239 = pneg %p100
        %p240 = pneg %p97
        %p241 = pneg %p121
        %p242 = pneg %p118
        %p243 = pneg %p142
        %p244 = pneg %p139
        %p245 = pneg %p170
        %p246 = pneg %p167
        %s247 = sand.u32 %s157, 1
        %s248 = scalar_lea.sflag [#allocation5], %s247
        %s249 = sand.u32 %s157, 1
        %s250 = smul.addr %s249, 16
        %s251 = scalar_lea.vmem [#allocation4], %s250
        %p252 = scmp.lt.s32.totalorder %s24, 0
        %s253 = scalar_select %p252, %s24, 0
        %p254 = scmp.lt.s32.totalorder %s23, 1
        %s255 = scalar_select %p254, %s23, 1
        %p256 = scmp.lt.s32.totalorder %s253, 0
        %s257 = scalar_select %p256, %s253, 0
        %s258 = smul.addr %s257, 2
        %s259 = smul.addr %s255, 2
        %s260 = sadd.s32 %s258, %s259
        %s261 = smul.addr %s260, 8
        %s262 = scalar_lea.vmem %s0, %s261
        %p263 = scmp.lt.s32.totalorder %s24, 0
        %s264 = scalar_select %p263, %s24, 0
        %p265 = scmp.eq.s32.totalorder %s24, 0
        // Predicated region
        $region41: #{tpu_custom_call.1} parent=39 // pred_check
          %p266 = pneg %p265
        $region42: #{tpu_custom_call.1} parent=39 // pred_check_branch
          %268 = sbr.rel (%p266) target = $region44
        $region43: #{tpu_custom_call.1} parent=39 // pred_region
          %vm269 = vcmask 408576
          %270 = vst.msk [vmem:[#allocation2] sm:$0xff] %vm269, 0.0
        $region44: #{tpu_custom_call.1} parent=39 // pred_fallthru
          _
        %p271 = scmp.lt.s32.totalorder %s24, 1
        // Predicated region
        $region45: #{tpu_custom_call.1} parent=39 // pred_check
          %p272 = pneg %p271
        $region46: #{tpu_custom_call.1} parent=39 // pred_check_branch
          %274 = sbr.rel (%p272) target = $region48
        $region47: #{tpu_custom_call.1} parent=39 // pred_region
          // Predicated region
          $region49: #{tpu_custom_call.1} parent=47 // pred_check
            _
          $region50: #{tpu_custom_call.1} parent=47 // pred_check_branch
            %276 = sbr.rel (0) target = $region52
          $region51: #{tpu_custom_call.1} parent=47 // pred_region
            loop: start=0, step=1, limit=1
            $region53: #{tpu_custom_call.1} parent=51 // loop_pre_header
              _
            $region54: #{tpu_custom_call.1} parent=51 // loop_header
              %s278 = sphi 0, %s282
              %p279 = scmp.ge.s32.totalorder %s278, 1
              %s283 = sphi %s262, %s262
              %s284 = sphi %s251, %s251
            $region55: #{tpu_custom_call.1} parent=51 // loop_header_branch
              %281 = sbr.rel (%p279) target = $region59
            $region56: #{tpu_custom_call.1} parent=51 // loop_body
              %v285 = vld [vmem:[%s283] sm:$0xff]
              %286 = vst [vmem:[%s284] sm:$0xff] %v285
              %v287 = vld [vmem:[%s283 + $0x8] sm:$0xff]
              %288 = vst [vmem:[%s284 + $0x8] sm:$0xff] %v287
            $region57: #{tpu_custom_call.1} parent=51 // loop_footer
              %s282 = sadd.s32 1, %s278
            $region58: #{tpu_custom_call.1} parent=51 // loop_footer_branch
              %277 = sbr.rel target = $region54
            $region59: #{tpu_custom_call.1} parent=51 // loop_exit
              _
          $region52: #{tpu_custom_call.1} parent=47 // pred_fallthru
            _
          // Predicated region
          $region60: #{tpu_custom_call.1} parent=47 // pred_check
            _
          $region61: #{tpu_custom_call.1} parent=47 // pred_check_branch
            %290 = sbr.rel target = $region63
          $region62: #{tpu_custom_call.1} parent=47 // pred_region
            _
          $region63: #{tpu_custom_call.1} parent=47 // pred_fallthru
            _
          // Predicated region
          $region64: #{tpu_custom_call.1} parent=47 // pred_check
            _
          $region65: #{tpu_custom_call.1} parent=47 // pred_check_branch
            %293 = sbr.rel (0) target = $region67
          $region66: #{tpu_custom_call.1} parent=47 // pred_region
            %294 = vsyncadd [#allocation3], 256
          $region67: #{tpu_custom_call.1} parent=47 // pred_fallthru
            _
          %v295 = vld [vmem:[%s262] sm:$0xff]
          %v296 = vld [vmem:[%s262 + $0x8] sm:$0xff]
          %v297 = vld [vmem:[%s1] sm:$0xff]
          %v298 = vld [vmem:[%s1 + $0x8] sm:$0xff]
          %v299 = vld [vmem:[%s1 + $0x10] sm:$0xff]
          %v300 = vld [vmem:[%s1 + $0x18] sm:$0xff]
          %v301 = vld [vmem:[%s1 + $0x20] sm:$0xff]
          %v302 = vld [vmem:[%s1 + $0x28] sm:$0xff]
          %v303 = vld [vmem:[%s1 + $0x30] sm:$0xff]
          %v304 = vld [vmem:[%s1 + $0x38] sm:$0xff]
          %v305 = vld [vmem:[%s1 + $0x40] sm:$0xff]
          %v306 = vld [vmem:[%s1 + $0x48] sm:$0xff]
          %v307 = vld [vmem:[%s1 + $0x50] sm:$0xff]
          %v308 = vld [vmem:[%s1 + $0x58] sm:$0xff]
          %v309 = vld [vmem:[%s1 + $0x60] sm:$0xff]
          %v310 = vld [vmem:[%s1 + $0x68] sm:$0xff]
          %v311 = vld [vmem:[%s1 + $0x70] sm:$0xff]
          %v312 = vld [vmem:[%s1 + $0x78] sm:$0xff]
          %v313 = vld [vmem:[%s1 + $0x80] sm:$0xff]
          %v314 = vld [vmem:[%s1 + $0x88] sm:$0xff]
          %v315 = vld [vmem:[%s1 + $0x90] sm:$0xff]
          %v316 = vld [vmem:[%s1 + $0x98] sm:$0xff]
          %v317 = vld [vmem:[%s1 + $0xa0] sm:$0xff]
          %v318 = vld [vmem:[%s1 + $0xa8] sm:$0xff]
          %v319 = vld [vmem:[%s1 + $0xb0] sm:$0xff]
          %v320 = vld [vmem:[%s1 + $0xb8] sm:$0xff]
          %v321 = vld [vmem:[%s1 + $0xc0] sm:$0xff]
          %v322 = vld [vmem:[%s1 + $0xc8] sm:$0xff]
          %v323 = vld [vmem:[%s1 + $0xd0] sm:$0xff]
          %v324 = vld [vmem:[%s1 + $0xd8] sm:$0xff]
          %v325 = vld [vmem:[%s1 + $0xe0] sm:$0xff]
          %v326 = vld [vmem:[%s1 + $0xe8] sm:$0xff]
          %v327 = vld [vmem:[%s1 + $0xf0] sm:$0xff]
          %v328 = vld [vmem:[%s1 + $0xf8] sm:$0xff]
          %329 = vmatpush.msra.mxu0 %v312
          %330 = vmatpush.msra.mxu0 %v311
          %331 = vmatpush.msra.mxu0 %v310
          %332 = vmatpush.msra.mxu0 %v309
          %333 = vmatpush.msra.mxu0 %v308
          %334 = vmatpush.msra.mxu0 %v307
          %335 = vmatpush.msra.mxu0 %v306
          %336 = vmatpush.msra.mxu0 %v305
          %337 = vmatpush.msra.mxu0 %v304
          %338 = vmatpush.msra.mxu0 %v303
          %339 = vmatpush.msra.mxu0 %v302
          %340 = vmatpush.msra.mxu0 %v301
          %341 = vmatpush.msra.mxu0 %v300
          %342 = vmatpush.msra.mxu0 %v299
          %343 = vmatpush.msra.mxu0 %v298
          %344 = vmatpush.msra.mxu0 %v297
          %345 = vmatmul.f32.gmra.mxu0 %v295
          %v346 = vpop.f32.mrf.mxu0
          %v347 = vadd.f32 0.0, %v346
          %348 = vdwg.mxu0
          %349 = vmatpush.msra.mxu0 %v328
          %350 = vmatpush.msra.mxu0 %v327
          %351 = vmatpush.msra.mxu0 %v326
          %352 = vmatpush.msra.mxu0 %v325
          %353 = vmatpush.msra.mxu0 %v324
          %354 = vmatpush.msra.mxu0 %v323
          %355 = vmatpush.msra.mxu0 %v322
          %356 = vmatpush.msra.mxu0 %v321
          %357 = vmatpush.msra.mxu0 %v320
          %358 = vmatpush.msra.mxu0 %v319
          %359 = vmatpush.msra.mxu0 %v318
          %360 = vmatpush.msra.mxu0 %v317
          %361 = vmatpush.msra.mxu0 %v316
          %362 = vmatpush.msra.mxu0 %v315
          %363 = vmatpush.msra.mxu0 %v314
          %364 = vmatpush.msra.mxu0 %v313
          %365 = vmatmul.f32.gmra.mxu0 %v296
          %v366 = vpop.f32.mrf.mxu0
          %v367 = vadd.f32 %v347, %v366
          %368 = vdwg.mxu0
          %s369 = smul.u32 %s24, 8
          %s370 = scalar_lea.vmem %s2, %s369
          %v371 = vld [vmem:[%s370] sm:$0xff]
          %v372 = vld [vmem:[#allocation2] sm:$0xff]
          %vm373 = vcmask 64512
          %v375 = vsel %vm373, %v371, 0
          %377 = vmatpush.msra.mxu0 0.0
          %378 = vmatpush.msra.mxu0 0.0
          %379 = vmatpush.msra.mxu0 0.0
          %380 = vmatpush.msra.mxu0 0.0
          %381 = vmatpush.msra.mxu0 0.0
          %382 = vmatpush.msra.mxu0 0.0
          %383 = vmatpush.msra.mxu0 0.0
          %384 = vmatpush.msra.mxu0 0.0
          %385 = vmatpush.msra.mxu0 0.0
          %386 = vmatpush.msra.mxu0 0.0
          %387 = vmatpush.msra.mxu0 0.0
          %388 = vmatpush.msra.mxu0 0.0
          %389 = vmatpush.msra.mxu0 0.0
          %390 = vmatpush.msra.mxu0 0.0
          %391 = vmatpush.msra.mxu0 0.0
          %392 = vmatpush.msra.mxu0 %v367
          %393 = vmatmul.f32.gmra.mxu0 %v375
          %v394 = vpop.f32.mrf.mxu0
          %v395 = vadd.f32 0.0, %v394
          %396 = vdwg.mxu0
          %v397 = vadd.f32 %v372, %v395
          %vm398 = vcmask 408576
          %399 = vst.msk [vmem:[#allocation2] sm:$0xff] %vm398, %v397
          %s400 = smul.u32 8, 1
          %s401 = smul.u32 %s400, 1
          %s402 = smul.u32 %s401, 2
          %s403 = sshll.u32 %s402, 4
          %404 = dma.done [#allocation3], %s403
        $region48: #{tpu_custom_call.1} parent=39 // pred_fallthru
          _
        %p405 = scmp.ge.s32.totalorder %s24, 1
        // Predicated region
        $region68: #{tpu_custom_call.1} parent=39 // pred_check
          %p406 = pneg %p405
        $region69: #{tpu_custom_call.1} parent=39 // pred_check_branch
          %408 = sbr.rel (%p406) target = $region71
        $region70: #{tpu_custom_call.1} parent=39 // pred_region
          %s409 = ssub.s32 %s24, 1
          %s410 = smul.u32 %s409, 8
          %s411 = scalar_lea.vmem [#allocation2], %s410
          %v412 = vld [vmem:[%s411] sm:$0xff]
          %s413 = scalar_lea.vmem %s4, %s410
          %v414 = vld [vmem:[%s413] sm:$0xff]
          %v415 = vadd.f32 %v412, %v414
          %v416 = vmax.f32 %v415, 0.0
          %v417 = vld [vmem:[%s3] sm:$0xff]
          %v418 = vld [vmem:[%s3 + $0x8] sm:$0xff]
          %v419 = vld [vmem:[%s3 + $0x10] sm:$0xff]
          %v420 = vld [vmem:[%s3 + $0x18] sm:$0xff]
          %v421 = vld [vmem:[%s3 + $0x20] sm:$0xff]
          %v422 = vld [vmem:[%s3 + $0x28] sm:$0xff]
          %v423 = vld [vmem:[%s3 + $0x30] sm:$0xff]
          %v424 = vld [vmem:[%s3 + $0x38] sm:$0xff]
          %v425 = vld [vmem:[%s3 + $0x40] sm:$0xff]
          %v426 = vld [vmem:[%s3 + $0x48] sm:$0xff]
          %v427 = vld [vmem:[%s3 + $0x50] sm:$0xff]
          %v428 = vld [vmem:[%s3 + $0x58] sm:$0xff]
          %v429 = vld [vmem:[%s3 + $0x60] sm:$0x3]
          %v430 = vld [vmem:[%s3 + $0x68] sm:$0x3]
          %vm431 = vcmask 408576
          %v433 = vsel %vm431, %v416, 0
          %vm435 = vcmask 1041408
          %v437 = vsel %vm435, %v429, 0
          %v440 = vsel %vm435, %v430, 0
          %442 = vmatpush.msra.mxu0 0.0
          %443 = vmatpush.msra.mxu0 0.0
          %444 = vmatpush.msra.mxu0 0.0
          %445 = vmatpush.msra.mxu0 0.0
          %446 = vmatpush.msra.mxu0 0.0
          %447 = vmatpush.msra.mxu0 0.0
          %448 = vmatpush.msra.mxu0 0.0
          %449 = vmatpush.msra.mxu0 0.0
          %450 = vmatpush.msra.mxu0 0.0
          %451 = vmatpush.msra.mxu0 %v437
          %452 = vmatpush.msra.mxu0 %v427
          %453 = vmatpush.msra.mxu0 %v425
          %454 = vmatpush.msra.mxu0 %v423
          %455 = vmatpush.msra.mxu0 %v421
          %456 = vmatpush.msra.mxu0 %v419
          %457 = vmatpush.msra.mxu0 %v417
          %458 = vmatmul.f32.gmra.mxu0 %v433
          %v459 = vpop.f32.mrf.mxu0
          %v460 = vadd.f32 0.0, %v459
          %461 = vdwg.mxu0
          %462 = vmatpush.msra.mxu0 0.0
          %463 = vmatpush.msra.mxu0 0.0
          %464 = vmatpush.msra.mxu0 0.0
          %465 = vmatpush.msra.mxu0 0.0
          %466 = vmatpush.msra.mxu0 0.0
          %467 = vmatpush.msra.mxu0 0.0
          %468 = vmatpush.msra.mxu0 0.0
          %469 = vmatpush.msra.mxu0 0.0
          %470 = vmatpush.msra.mxu0 0.0
          %471 = vmatpush.msra.mxu0 %v440
          %472 = vmatpush.msra.mxu0 %v428
          %473 = vmatpush.msra.mxu0 %v426
          %474 = vmatpush.msra.mxu0 %v424
          %475 = vmatpush.msra.mxu0 %v422
          %476 = vmatpush.msra.mxu0 %v420
          %477 = vmatpush.msra.mxu0 %v418
          %478 = vmatmul.f32.gmra.mxu0 %v433
          %v479 = vpop.f32.mrf.mxu0
          %v480 = vadd.f32 0.0, %v479
          %481 = vdwg.mxu0
          %482 = vst [vmem:[%s251] sm:$0xff] %v460
          %483 = vst [vmem:[%s251 + $0x8] sm:$0xff] %v480
        $region71: #{tpu_custom_call.1} parent=39 // pred_fallthru
          _
        %s484 = sand.u32 %s157, 1
        %s485 = scalar_lea.sflag [#allocation5], %s484
        %s486 = sand.u32 %s157, 1
        %s487 = smul.addr %s486, 16
        %s488 = scalar_lea.vmem [#allocation4], %s487
        // Predicated region
        $region72: #{tpu_custom_call.1} parent=39 // pred_check
          %p489 = pneg %p167
        $region73: #{tpu_custom_call.1} parent=39 // pred_check_branch
          %491 = sbr.rel (%p489) target = $region75
        $region74: #{tpu_custom_call.1} parent=39 // pred_region
          %493 = vsyncadd %s485, 0
          %s494 = smul.addr %s24, 2
          %s495 = smul.addr %s23, 4
          %s496 = sadd.s32 %s494, %s495
          %s497 = smul.addr %s496, 8
          %s498 = scalar_lea.hbm %s5, %s497
          %s500 = sshll.u32 %s488, 4
          %s501 = int_to_ptr.vmem [resolvable:$true] %s500
          %s502 = sshll.u32 %s498, 4
          %s503 = int_to_ptr.hbm [resolvable:$true] %s502
          %505 = dma.vmem_to_hbm [thread:$0]  %s501, 256, %s503, %s485
        $region75: #{tpu_custom_call.1} parent=39 // pred_fallthru
          _
      $region40: #{tpu_custom_call.1} parent=5 // pred_fallthru
        _
      %p506 = scmp.le.s32.totalorder 2, %s14
      // Predicated region
      $region76: #{tpu_custom_call.1} parent=5 // pred_check
        %p507 = pneg %p506
      $region77: #{tpu_custom_call.1} parent=5 // pred_check_branch
        %509 = sbr.rel (%p507) target = $region79
      $region78: #{tpu_custom_call.1} parent=5 // pred_region
        %s510 = ssub.s32 %s14, 2
        // Predicated region
        $region80: #{tpu_custom_call.1} parent=78 // pred_check
          %p511 = pneg %p173
        $region81: #{tpu_custom_call.1} parent=78 // pred_check_branch
          %513 = sbr.rel (%p511) target = $region83
        $region82: #{tpu_custom_call.1} parent=78 // pred_region
          %s514 = sand.u32 %s158, 1
          %s515 = scalar_lea.sflag [#allocation5], %s514
          %s516 = sand.u32 %s158, 1
          %s517 = smul.addr %s516, 16
          %s518 = scalar_lea.vmem [#allocation4], %s517
          %520 = dma.done %s515, 256
        $region83: #{tpu_custom_call.1} parent=78 // pred_fallthru
          _
      $region79: #{tpu_custom_call.1} parent=5 // pred_fallthru
        _
    $region6: #{tpu_custom_call.1} parent=1 // loop_footer
      %s18 = sadd.s32 1, %s14
    $region7: #{tpu_custom_call.1} parent=1 // loop_footer_branch
      %13 = sbr.rel target = $region3
    $region8: #{tpu_custom_call.1} parent=1 // loop_exit
      _
    %521 = vsyncpa [#allocation5], 1
    %s522 = scalar_lea.sflag [#allocation5], 1
    %523 = vsyncpa %s522, 1
  %524 = vsyncmov [#allocation3]
  %s525 = vpop.sfrf %524
  %p526 = scmp.eq.s32.totalorder %s525, 0
  %p527 = pneg %p526
  %529 = shalt.err (%p527)

</llo_original>
